<compile_context>
chip_gen: v6e
topology: v6e:2x2x1
jax: 0.10.0
libtpu: 0.0.40
codegen_flags: <defaults>
</compile_context>

<pallas_src>
import functools

import jax
import jax.numpy as jnp
import numpy as np
from jax.experimental import pallas as pl
from jax.experimental.pallas import tpu as pltpu


def _softmax_rows(v):
    v = v - jnp.max(v, axis=-1, keepdims=True)
    e = jnp.exp(v)
    return e / jnp.sum(e, axis=-1, keepdims=True)


def _late_fusion_kernel(x_ref, y_ref, z_ref, d_ref,
                        w1x_ref, w1y_ref, w1z_ref, b1_ref, w2_ref, b2_ref,
                        w3h_ref, w3d_ref, b3_ref, w4_ref, b4_ref,
                        wfc_ref, bfc_ref,
                        out_ref,
                        sx_ref, sy_ref, sz_ref, sd_ref,
                        *, inv_s):
    k = pl.program_id(0)

    @pl.when(k == 0)
    def _init():
        sx_ref[...] = jnp.zeros_like(sx_ref)
        sy_ref[...] = jnp.zeros_like(sy_ref)
        sz_ref[...] = jnp.zeros_like(sz_ref)
        sd_ref[...] = jnp.zeros_like(sd_ref)

    # --- streaming spatial reduction: the inner loop is pure DMA + reduce ----
    # (per-tile partial sums; the single 1/S scale is applied in finalize)
    sx_ref[...] += jnp.sum(x_ref[...].astype(jnp.float32), axis=-1)
    sy_ref[...] += jnp.sum(y_ref[...].astype(jnp.float32), axis=-1)
    sz_ref[...] += jnp.sum(z_ref[...].astype(jnp.float32), axis=-1)
    sd_ref[...] += jnp.sum(d_ref[...].astype(jnp.float32), axis=-1)

    @pl.when(k == pl.num_programs(0) - 1)
    def _finalize():
        inv = jnp.float32(inv_s)
        x_pool = sx_ref[...] * inv          # (B, C)  == AdaptiveAvgPool2d(1)
        y_pool = sy_ref[...] * inv
        z_pool = sz_ref[...] * inv
        d_pool = sd_ref[...] * inv

        # fusion_xyz: Linear(3C->C) split into 3 partial matmuls (no lane-axis
        # concat) + ReLU + Linear(C->C) + Softmax(dim=1)
        t = (jnp.dot(x_pool, w1x_ref[...], preferred_element_type=jnp.float32)
             + jnp.dot(y_pool, w1y_ref[...], preferred_element_type=jnp.float32)
             + jnp.dot(z_pool, w1z_ref[...], preferred_element_type=jnp.float32)
             + b1_ref[...])
        t = jnp.maximum(t, 0.0)
        t = jnp.dot(t, w2_ref[...], preferred_element_type=jnp.float32) + b2_ref[...]
        h_w = _softmax_rows(t)              # (B, C); only cols 0..2 used below

        # mean(x*a + y*b + z*c) == mean(x)*a + mean(y)*b + mean(z)*c
        h_pool = (x_pool * h_w[:, 0:1] + y_pool * h_w[:, 1:2]
                  + z_pool * h_w[:, 2:3])   # (B, C)

        # fusion_h_down: Linear(2C->2C) split into 2 partial matmuls + ReLU +
        # Linear(2C->2) + Softmax(dim=1)
        g = (jnp.dot(h_pool, w3h_ref[...], preferred_element_type=jnp.float32)
             + jnp.dot(d_pool, w3d_ref[...], preferred_element_type=jnp.float32)
             + b3_ref[...])
        g = jnp.maximum(g, 0.0)
        g = jnp.dot(g, w4_ref[...], preferred_element_type=jnp.float32) + b4_ref[...]
        f_w = _softmax_rows(g)              # (B, 2)

        # fused = h * f_w[:, 0] + down * f_w[:, 1]  (channel-indexed broadcast,
        # requires B == C or B == 1).  Pooled and folded into the fc weights so
        # the per-channel scale stays on the sublane axis (no relayout):
        #   mean(fused) @ wfc == h_pool @ (f_w[:,0:1]*wfc) + d_pool @ (f_w[:,1:2]*wfc)
        wfc = wfc_ref[...]
        wfc_h = f_w[:, 0:1] * wfc           # (C, 128)
        wfc_d = f_w[:, 1:2] * wfc
        out_ref[...] = (jnp.dot(h_pool, wfc_h, preferred_element_type=jnp.float32)
                        + jnp.dot(d_pool, wfc_d, preferred_element_type=jnp.float32)
                        + bfc_ref[...])


def _pick_spatial_tile(B, C, S, itemsize,
                       input_budget_bytes=24 * 1024 * 1024, preferred=1024):
    """Largest lane-aligned spatial tile (capped at `preferred`) whose four
    double-buffered input blocks fit the VMEM budget (budget derived for v7x's
    64 MiB VMEM; also safe on v5e / v6e)."""
    if S % 128 != 0:
        return S                                    # full spatial extent
    per_lane = 4 * 2 * B * C * itemsize             # 4 maps x 2 pipeline bufs
    max_ts = max(128, (input_budget_bytes // per_lane) // 128 * 128)
    ts = min(S, max_ts, preferred)
    while S % ts != 0:
        ts -= 128
    return ts


def late_multi_view_fusion(x, y, z, d, params, *, map_dtype=None):
    """x, y, z, d: NCHW float32 arrays of identical shape (B, C, H, W).

    `map_dtype=None` streams the maps in their native dtype (no extra cast
    pass over HBM).  Pass e.g. jnp.bfloat16 only if the producers already
    emit bf16 maps."""
    B, C, H, W = x.shape
    if not (B == C or B == 1):
        raise ValueError(
            "LateMultiViewFusion's `h * final_weights[:, 0]` broadcast only "
            f"type-checks for B == C (or B == 1); got B={B}, C={C}.")
    S = H * W
    maps = [a.reshape(B, C, S) for a in (x, y, z, d)]   # contiguous: free
    if map_dtype is not None:
        maps = [m.astype(map_dtype) for m in maps]

    w1, b1, w2, b2, w3, b3, w4, b4, wfc, bfc = params
    # Split the concat-matmuls into partial matmuls (avoids lane-axis concat).
    w1x, w1y, w1z = w1[:C], w1[C:2 * C], w1[2 * C:3 * C]
    w3h, w3d = w3[:C], w3[C:2 * C]
    weights = (w1x, w1y, w1z, b1, w2, b2, w3h, w3d, b3, w4, b4, wfc, bfc)

    ts = _pick_spatial_tile(B, C, S, jnp.dtype(maps[0].dtype).itemsize)
    grid = (S // ts,)

    map_spec = pl.BlockSpec((B, C, ts), lambda k: (0, 0, k))

    def resident(a):                      # whole (tiny) array, VMEM-resident
        zeros = (0,) * a.ndim
        return pl.BlockSpec(a.shape, lambda k: zeros)

    kernel = functools.partial(_late_fusion_kernel, inv_s=1.0 / S)

    out = pl.pallas_call(
        kernel,
        out_shape=jax.ShapeDtypeStruct((B, 128), jnp.float32),
        grid=grid,
        in_specs=[map_spec] * 4 + [resident(w) for w in weights],
        out_specs=pl.BlockSpec((B, 128), lambda k: (0, 0)),
        scratch_shapes=[pltpu.VMEM((B, C), jnp.float32) for _ in range(4)],
        compiler_params=pltpu.CompilerParams(
            # TODO(synk): for very large S on v7x, add a leading "parallel"
            # grid axis with per-core partial sums so both TensorCores stream;
            # the channel-indexed final broadcast needs the whole batch, so the
            # finalize MLP must remain on a single core.
            dimension_semantics=("arbitrary",),
            vmem_limit_bytes=32 * 1024 * 1024,
        ),
    )(*maps, *weights)
    return out


def init_params(key, channels):
    C = channels

    def linear(k, fan_in, fan_out):
        kw, kb = jax.random.split(k)
        bound = 1.0 / np.sqrt(fan_in)
        w = jax.random.uniform(kw, (fan_in, fan_out), jnp.float32, -bound, bound)
        b = jax.random.uniform(kb, (1, fan_out), jnp.float32, -bound, bound)
        return w, b

    k1, k2, k3, k4, k5 = jax.random.split(key, 5)
    w1, b1 = linear(k1, 3 * C, C)        # fusion_xyz[0]
    w2, b2 = linear(k2, C, C)            # fusion_xyz[2]
    w3, b3 = linear(k3, 2 * C, 2 * C)    # fusion_h_down[0]
    w4, b4 = linear(k4, 2 * C, 2)        # fusion_h_down[2]
    wfc, bfc = linear(k5, C, 128)        # fc
    return (w1, b1, w2, b2, w3, b3, w4, b4, wfc, bfc)


def reference(x, y, z, d, params, *, map_dtype=None):
    """Pure-JAX replica of the PyTorch forward (NCHW, same broadcast rules)."""
    if map_dtype is not None:
        q = lambda a: a.astype(map_dtype).astype(jnp.float32)
        x, y, z, d = q(x), q(y), q(z), q(d)
    w1, b1, w2, b2, w3, b3, w4, b4, wfc, bfc = params
    gap = lambda a: jnp.mean(a, axis=(2, 3))
    x_pool, y_pool, z_pool, d_pool = gap(x), gap(y), gap(z), gap(d)
    xyz = jnp.concatenate([x_pool, y_pool, z_pool], axis=1)
    t = jnp.maximum(xyz @ w1 + b1, 0.0) @ w2 + b2
    h_w = jax.nn.softmax(t, axis=1)[:, :, None, None]
    h = x * h_w[:, 0:1] + y * h_w[:, 1:2] + z * h_w[:, 2:3]
    hd = jnp.concatenate([gap(h), d_pool], axis=1)
    g = jnp.maximum(hd @ w3 + b3, 0.0) @ w4 + b4
    f_w = jax.nn.softmax(g, axis=1)[:, :, None, None]
    fused = h * f_w[:, 0] + d * f_w[:, 1]   # same channel-indexed broadcast as torch
    return gap(fused) @ wfc + bfc


if __name__ == "__main__":
    key = jax.random.PRNGKey(0)
    kx, ky, kz, kd, kp = jax.random.split(key, 5)
    B = 8            # must equal channels (module's broadcast, see note above)
    C = 8
    H = W = 48       # S = 2304 -> three 768-wide spatial tiles (grid = (3,))
    x = jax.random.normal(kx, (B, C, H, W), jnp.float32)
    y = jax.random.normal(ky, (B, C, H, W), jnp.float32)
    z = jax.random.normal(kz, (B, C, H, W), jnp.float32)
    d = jax.random.normal(kd, (B, C, H, W), jnp.float32)
    params = init_params(kp, C)

    out = late_multi_view_fusion(x, y, z, d, params)
    out = jax.block_until_ready(out)

    ref = reference(x, y, z, d, params)
    assert out.shape == (B, 128)
    np.testing.assert_allclose(np.asarray(out), np.asarray(ref),
                               rtol=1e-4, atol=1e-4)
    print("KERNEL_OK")
</pallas_src>

<mosaic_0001>
module attributes {stable_mosaic.version = 11 : i64} {
  func.func @_late_fusion_kernel(%arg0: i32, %arg1: memref<8x8x768xf32, #tpu.memory_space<vmem>>, %arg2: memref<8x8x768xf32, #tpu.memory_space<vmem>>, %arg3: memref<8x8x768xf32, #tpu.memory_space<vmem>>, %arg4: memref<8x8x768xf32, #tpu.memory_space<vmem>>, %arg5: memref<8x8xf32, #tpu.memory_space<vmem>>, %arg6: memref<8x8xf32, #tpu.memory_space<vmem>>, %arg7: memref<8x8xf32, #tpu.memory_space<vmem>>, %arg8: memref<1x8xf32, #tpu.memory_space<vmem>>, %arg9: memref<8x8xf32, #tpu.memory_space<vmem>>, %arg10: memref<1x8xf32, #tpu.memory_space<vmem>>, %arg11: memref<8x16xf32, #tpu.memory_space<vmem>>, %arg12: memref<8x16xf32, #tpu.memory_space<vmem>>, %arg13: memref<1x16xf32, #tpu.memory_space<vmem>>, %arg14: memref<16x2xf32, #tpu.memory_space<vmem>>, %arg15: memref<1x2xf32, #tpu.memory_space<vmem>>, %arg16: memref<8x128xf32, #tpu.memory_space<vmem>>, %arg17: memref<1x128xf32, #tpu.memory_space<vmem>>, %arg18: memref<8x128xf32, #tpu.memory_space<vmem>>, %arg19: memref<8x8xf32, #tpu.memory_space<vmem>>, %arg20: memref<8x8xf32, #tpu.memory_space<vmem>>, %arg21: memref<8x8xf32, #tpu.memory_space<vmem>>, %arg22: memref<8x8xf32, #tpu.memory_space<vmem>>) attributes {dimension_semantics = [#tpu.dimension_semantics<arbitrary>], iteration_bounds = array<i64: 3>, scalar_prefetch = 0 : i64, scratch_operands = 4 : i64, tpu.core_type = #tpu.core_type<tc>, window_params = [{transform_indices = @transform_0, window_bounds = array<i64: 8, 8, 768>}, {transform_indices = @transform_1, window_bounds = array<i64: 8, 8, 768>}, {transform_indices = @transform_2, window_bounds = array<i64: 8, 8, 768>}, {transform_indices = @transform_3, window_bounds = array<i64: 8, 8, 768>}, {pipeline_mode = #tpu.pipeline_mode<synchronous>, transform_indices = @transform_4, window_bounds = array<i64: 8, 8>}, {pipeline_mode = #tpu.pipeline_mode<synchronous>, transform_indices = @transform_5, window_bounds = array<i64: 8, 8>}, {pipeline_mode = #tpu.pipeline_mode<synchronous>, transform_indices = @transform_6, window_bounds = array<i64: 8, 8>}, {pipeline_mode = #tpu.pipeline_mode<synchronous>, transform_indices = @transform_7, window_bounds = array<i64: 1, 8>}, {pipeline_mode = #tpu.pipeline_mode<synchronous>, transform_indices = @transform_8, window_bounds = array<i64: 8, 8>}, {pipeline_mode = #tpu.pipeline_mode<synchronous>, transform_indices = @transform_9, window_bounds = array<i64: 1, 8>}, {pipeline_mode = #tpu.pipeline_mode<synchronous>, transform_indices = @transform_10, window_bounds = array<i64: 8, 16>}, {pipeline_mode = #tpu.pipeline_mode<synchronous>, transform_indices = @transform_11, window_bounds = array<i64: 8, 16>}, {pipeline_mode = #tpu.pipeline_mode<synchronous>, transform_indices = @transform_12, window_bounds = array<i64: 1, 16>}, {pipeline_mode = #tpu.pipeline_mode<synchronous>, transform_indices = @transform_13, window_bounds = array<i64: 16, 2>}, {pipeline_mode = #tpu.pipeline_mode<synchronous>, transform_indices = @transform_14, window_bounds = array<i64: 1, 2>}, {pipeline_mode = #tpu.pipeline_mode<synchronous>, transform_indices = @transform_15, window_bounds = array<i64: 8, 128>}, {pipeline_mode = #tpu.pipeline_mode<synchronous>, transform_indices = @transform_16, window_bounds = array<i64: 1, 128>}, {pipeline_mode = #tpu.pipeline_mode<synchronous>, transform_indices = @transform_17, window_bounds = array<i64: 8, 128>}]} {
    %c0_i32 = arith.constant 0 : i32
    %0 = arith.cmpi eq, %arg0, %c0_i32 : i32
    %1 = arith.extui %0 : i1 to i32
    %c0_i32_0 = arith.constant 0 : i32
    %2 = arith.cmpi ne, %1, %c0_i32_0 : i32
    scf.if %2 {
      %cst_32 = arith.constant 0.000000e+00 : f32
      %26 = vector.broadcast %cst_32 : f32 to vector<8x8xf32>
      %c0_33 = arith.constant 0 : index
      %c0_34 = arith.constant 0 : index
      %27 = vector.load %arg19[%c0_33, %c0_34] : memref<8x8xf32, #tpu.memory_space<vmem>>, vector<8x8xf32>
      tpu.vector_store %arg19[%c0_33, %c0_34], %26 {strides = array<i32>} : memref<8x8xf32, #tpu.memory_space<vmem>>, vector<8x8xf32>,
      %cst_35 = arith.constant 0.000000e+00 : f32
      %28 = vector.broadcast %cst_35 : f32 to vector<8x8xf32>
      %c0_36 = arith.constant 0 : index
      %c0_37 = arith.constant 0 : index
      %29 = vector.load %arg20[%c0_36, %c0_37] : memref<8x8xf32, #tpu.memory_space<vmem>>, vector<8x8xf32>
      tpu.vector_store %arg20[%c0_36, %c0_37], %28 {strides = array<i32>} : memref<8x8xf32, #tpu.memory_space<vmem>>, vector<8x8xf32>,
      %cst_38 = arith.constant 0.000000e+00 : f32
      %30 = vector.broadcast %cst_38 : f32 to vector<8x8xf32>
      %c0_39 = arith.constant 0 : index
      %c0_40 = arith.constant 0 : index
      %31 = vector.load %arg21[%c0_39, %c0_40] : memref<8x8xf32, #tpu.memory_space<vmem>>, vector<8x8xf32>
      tpu.vector_store %arg21[%c0_39, %c0_40], %30 {strides = array<i32>} : memref<8x8xf32, #tpu.memory_space<vmem>>, vector<8x8xf32>,
      %cst_41 = arith.constant 0.000000e+00 : f32
      %32 = vector.broadcast %cst_41 : f32 to vector<8x8xf32>
      %c0_42 = arith.constant 0 : index
      %c0_43 = arith.constant 0 : index
      %33 = vector.load %arg22[%c0_42, %c0_43] : memref<8x8xf32, #tpu.memory_space<vmem>>, vector<8x8xf32>
      tpu.vector_store %arg22[%c0_42, %c0_43], %32 {strides = array<i32>} : memref<8x8xf32, #tpu.memory_space<vmem>>, vector<8x8xf32>,
    } else {
    }
    %c0 = arith.constant 0 : index
    %c0_1 = arith.constant 0 : index
    %3 = vector.load %arg19[%c0, %c0_1] : memref<8x8xf32, #tpu.memory_space<vmem>>, vector<8x8xf32>
    %c0_2 = arith.constant 0 : index
    %c0_3 = arith.constant 0 : index
    %c0_4 = arith.constant 0 : index
    %4 = vector.load %arg1[%c0_2, %c0_3, %c0_4] : memref<8x8x768xf32, #tpu.memory_space<vmem>>, vector<8x8x768xf32>
    %cst = arith.constant dense<0.000000e+00> : vector<8x8xf32>
    %5 = vector.multi_reduction <add>, %4, %cst [2] : vector<8x8x768xf32> to vector<8x8xf32>
    %6 = arith.addf %3, %5 : vector<8x8xf32>
    %c0_5 = arith.constant 0 : index
    %c0_6 = arith.constant 0 : index
    %7 = vector.load %arg19[%c0_5, %c0_6] : memref<8x8xf32, #tpu.memory_space<vmem>>, vector<8x8xf32>
    tpu.vector_store %arg19[%c0_5, %c0_6], %6 {strides = array<i32>} : memref<8x8xf32, #tpu.memory_space<vmem>>, vector<8x8xf32>,
    %c0_7 = arith.constant 0 : index
    %c0_8 = arith.constant 0 : index
    %8 = vector.load %arg20[%c0_7, %c0_8] : memref<8x8xf32, #tpu.memory_space<vmem>>, vector<8x8xf32>
    %c0_9 = arith.constant 0 : index
    %c0_10 = arith.constant 0 : index
    %c0_11 = arith.constant 0 : index
    %9 = vector.load %arg2[%c0_9, %c0_10, %c0_11] : memref<8x8x768xf32, #tpu.memory_space<vmem>>, vector<8x8x768xf32>
    %cst_12 = arith.constant dense<0.000000e+00> : vector<8x8xf32>
    %10 = vector.multi_reduction <add>, %9, %cst_12 [2] : vector<8x8x768xf32> to vector<8x8xf32>
    %11 = arith.addf %8, %10 : vector<8x8xf32>
    %c0_13 = arith.constant 0 : index
    %c0_14 = arith.constant 0 : index
    %12 = vector.load %arg20[%c0_13, %c0_14] : memref<8x8xf32, #tpu.memory_space<vmem>>, vector<8x8xf32>
    tpu.vector_store %arg20[%c0_13, %c0_14], %11 {strides = array<i32>} : memref<8x8xf32, #tpu.memory_space<vmem>>, vector<8x8xf32>,
    %c0_15 = arith.constant 0 : index
    %c0_16 = arith.constant 0 : index
    %13 = vector.load %arg21[%c0_15, %c0_16] : memref<8x8xf32, #tpu.memory_space<vmem>>, vector<8x8xf32>
    %c0_17 = arith.constant 0 : index
    %c0_18 = arith.constant 0 : index
    %c0_19 = arith.constant 0 : index
    %14 = vector.load %arg3[%c0_17, %c0_18, %c0_19] : memref<8x8x768xf32, #tpu.memory_space<vmem>>, vector<8x8x768xf32>
    %cst_20 = arith.constant dense<0.000000e+00> : vector<8x8xf32>
    %15 = vector.multi_reduction <add>, %14, %cst_20 [2] : vector<8x8x768xf32> to vector<8x8xf32>
    %16 = arith.addf %13, %15 : vector<8x8xf32>
    %c0_21 = arith.constant 0 : index
    %c0_22 = arith.constant 0 : index
    %17 = vector.load %arg21[%c0_21, %c0_22] : memref<8x8xf32, #tpu.memory_space<vmem>>, vector<8x8xf32>
    tpu.vector_store %arg21[%c0_21, %c0_22], %16 {strides = array<i32>} : memref<8x8xf32, #tpu.memory_space<vmem>>, vector<8x8xf32>,
    %c0_23 = arith.constant 0 : index
    %c0_24 = arith.constant 0 : index
    %18 = vector.load %arg22[%c0_23, %c0_24] : memref<8x8xf32, #tpu.memory_space<vmem>>, vector<8x8xf32>
    %c0_25 = arith.constant 0 : index
    %c0_26 = arith.constant 0 : index
    %c0_27 = arith.constant 0 : index
    %19 = vector.load %arg4[%c0_25, %c0_26, %c0_27] : memref<8x8x768xf32, #tpu.memory_space<vmem>>, vector<8x8x768xf32>
    %cst_28 = arith.constant dense<0.000000e+00> : vector<8x8xf32>
    %20 = vector.multi_reduction <add>, %19, %cst_28 [2] : vector<8x8x768xf32> to vector<8x8xf32>
    %21 = arith.addf %18, %20 : vector<8x8xf32>
    %c0_29 = arith.constant 0 : index
    %c0_30 = arith.constant 0 : index
    %22 = vector.load %arg22[%c0_29, %c0_30] : memref<8x8xf32, #tpu.memory_space<vmem>>, vector<8x8xf32>
    tpu.vector_store %arg22[%c0_29, %c0_30], %21 {strides = array<i32>} : memref<8x8xf32, #tpu.memory_space<vmem>>, vector<8x8xf32>,
    %c2_i32 = arith.constant 2 : i32
    %23 = arith.cmpi eq, %arg0, %c2_i32 : i32
    %24 = arith.extui %23 : i1 to i32
    %c0_i32_31 = arith.constant 0 : i32
    %25 = arith.cmpi ne, %24, %c0_i32_31 : i32
    scf.if %25 {
      %c0_32 = arith.constant 0 : index
      %c0_33 = arith.constant 0 : index
      %26 = vector.load %arg19[%c0_32, %c0_33] : memref<8x8xf32, #tpu.memory_space<vmem>>, vector<8x8xf32>
      %cst_34 = arith.constant 4.34027781E-4 : f32
      %27 = vector.broadcast %cst_34 : f32 to vector<8x8xf32>
      %28 = arith.mulf %26, %27 : vector<8x8xf32>
      %c0_35 = arith.constant 0 : index
      %c0_36 = arith.constant 0 : index
      %29 = vector.load %arg20[%c0_35, %c0_36] : memref<8x8xf32, #tpu.memory_space<vmem>>, vector<8x8xf32>
      %cst_37 = arith.constant 4.34027781E-4 : f32
      %30 = vector.broadcast %cst_37 : f32 to vector<8x8xf32>
      %31 = arith.mulf %29, %30 : vector<8x8xf32>
      %c0_38 = arith.constant 0 : index
      %c0_39 = arith.constant 0 : index
      %32 = vector.load %arg21[%c0_38, %c0_39] : memref<8x8xf32, #tpu.memory_space<vmem>>, vector<8x8xf32>
      %cst_40 = arith.constant 4.34027781E-4 : f32
      %33 = vector.broadcast %cst_40 : f32 to vector<8x8xf32>
      %34 = arith.mulf %32, %33 : vector<8x8xf32>
      %c0_41 = arith.constant 0 : index
      %c0_42 = arith.constant 0 : index
      %35 = vector.load %arg22[%c0_41, %c0_42] : memref<8x8xf32, #tpu.memory_space<vmem>>, vector<8x8xf32>
      %cst_43 = arith.constant 4.34027781E-4 : f32
      %36 = vector.broadcast %cst_43 : f32 to vector<8x8xf32>
      %37 = arith.mulf %35, %36 : vector<8x8xf32>
      %c0_44 = arith.constant 0 : index
      %c0_45 = arith.constant 0 : index
      %38 = vector.load %arg5[%c0_44, %c0_45] : memref<8x8xf32, #tpu.memory_space<vmem>>, vector<8x8xf32>
      %cst_46 = arith.constant dense<0.000000e+00> : vector<8x8xf32>
      %39 = tpu.matmul %28, %38, %cst_46 {dimension_numbers = #tpu.dot_dimension_numbers<[1], [0], [0], [1], [0, 0, 1, 1], [], []>} : vector<8x8xf32>, vector<8x8xf32>, vector<8x8xf32> -> vector<8x8xf32>
      %c0_47 = arith.constant 0 : index
      %c0_48 = arith.constant 0 : index
      %40 = vector.load %arg6[%c0_47, %c0_48] : memref<8x8xf32, #tpu.memory_space<vmem>>, vector<8x8xf32>
      %cst_49 = arith.constant dense<0.000000e+00> : vector<8x8xf32>
      %41 = tpu.matmul %31, %40, %cst_49 {dimension_numbers = #tpu.dot_dimension_numbers<[1], [0], [0], [1], [0, 0, 1, 1], [], []>} : vector<8x8xf32>, vector<8x8xf32>, vector<8x8xf32> -> vector<8x8xf32>
      %42 = arith.addf %39, %41 : vector<8x8xf32>
      %c0_50 = arith.constant 0 : index
      %c0_51 = arith.constant 0 : index
      %43 = vector.load %arg7[%c0_50, %c0_51] : memref<8x8xf32, #tpu.memory_space<vmem>>, vector<8x8xf32>
      %cst_52 = arith.constant dense<0.000000e+00> : vector<8x8xf32>
      %44 = tpu.matmul %34, %43, %cst_52 {dimension_numbers = #tpu.dot_dimension_numbers<[1], [0], [0], [1], [0, 0, 1, 1], [], []>} : vector<8x8xf32>, vector<8x8xf32>, vector<8x8xf32> -> vector<8x8xf32>
      %45 = arith.addf %42, %44 : vector<8x8xf32>
      %c0_53 = arith.constant 0 : index
      %c0_54 = arith.constant 0 : index
      %46 = vector.load %arg8[%c0_53, %c0_54] : memref<1x8xf32, #tpu.memory_space<vmem>>, vector<1x8xf32>
      %47 = vector.broadcast %46 : vector<1x8xf32> to vector<8x8xf32>
      %48 = arith.addf %45, %47 : vector<8x8xf32>
      %cst_55 = arith.constant 0.000000e+00 : f32
      %49 = vector.broadcast %cst_55 : f32 to vector<8x8xf32>
      %50 = arith.maximumf %48, %49 : vector<8x8xf32>
      %c0_56 = arith.constant 0 : index
      %c0_57 = arith.constant 0 : index
      %51 = vector.load %arg9[%c0_56, %c0_57] : memref<8x8xf32, #tpu.memory_space<vmem>>, vector<8x8xf32>
      %cst_58 = arith.constant dense<0.000000e+00> : vector<8x8xf32>
      %52 = tpu.matmul %50, %51, %cst_58 {dimension_numbers = #tpu.dot_dimension_numbers<[1], [0], [0], [1], [0, 0, 1, 1], [], []>} : vector<8x8xf32>, vector<8x8xf32>, vector<8x8xf32> -> vector<8x8xf32>
      %c0_59 = arith.constant 0 : index
      %c0_60 = arith.constant 0 : index
      %53 = vector.load %arg10[%c0_59, %c0_60] : memref<1x8xf32, #tpu.memory_space<vmem>>, vector<1x8xf32>
      %54 = vector.broadcast %53 : vector<1x8xf32> to vector<8x8xf32>
      %55 = arith.addf %52, %54 : vector<8x8xf32>
      %cst_61 = arith.constant dense<0xFF800000> : vector<8xf32>
      %56 = vector.multi_reduction <maximumf>, %55, %cst_61 [1] : vector<8x8xf32> to vector<8xf32>
      %57 = vector.shape_cast %56 : vector<8xf32> to vector<8x1xf32>
      %58 = vector.broadcast %57 : vector<8x1xf32> to vector<8x8xf32>
      %59 = arith.subf %55, %58 : vector<8x8xf32>
      %60 = math.exp %59 : vector<8x8xf32>
      %cst_62 = arith.constant dense<0.000000e+00> : vector<8xf32>
      %61 = vector.multi_reduction <add>, %60, %cst_62 [1] : vector<8x8xf32> to vector<8xf32>
      %62 = vector.shape_cast %61 : vector<8xf32> to vector<8x1xf32>
      %63 = vector.broadcast %62 : vector<8x1xf32> to vector<8x8xf32>
      %64 = arith.divf %60, %63 : vector<8x8xf32>
      %65 = vector.extract_strided_slice %64 {offsets = [0, 0], sizes = [8, 1], strides = [1, 1]} : vector<8x8xf32> to vector<8x1xf32>
      %66 = vector.broadcast %65 : vector<8x1xf32> to vector<8x8xf32>
      %67 = arith.mulf %28, %66 : vector<8x8xf32>
      %68 = vector.extract_strided_slice %64 {offsets = [0, 1], sizes = [8, 1], strides = [1, 1]} : vector<8x8xf32> to vector<8x1xf32>
      %69 = vector.broadcast %68 : vector<8x1xf32> to vector<8x8xf32>
      %70 = arith.mulf %31, %69 : vector<8x8xf32>
      %71 = arith.addf %67, %70 : vector<8x8xf32>
      %72 = vector.extract_strided_slice %64 {offsets = [0, 2], sizes = [8, 1], strides = [1, 1]} : vector<8x8xf32> to vector<8x1xf32>
      %73 = vector.broadcast %72 : vector<8x1xf32> to vector<8x8xf32>
      %74 = arith.mulf %34, %73 : vector<8x8xf32>
      %75 = arith.addf %71, %74 : vector<8x8xf32>
      %c0_63 = arith.constant 0 : index
      %c0_64 = arith.constant 0 : index
      %76 = vector.load %arg11[%c0_63, %c0_64] : memref<8x16xf32, #tpu.memory_space<vmem>>, vector<8x16xf32>
      %cst_65 = arith.constant dense<0.000000e+00> : vector<8x16xf32>
      %77 = tpu.matmul %75, %76, %cst_65 {dimension_numbers = #tpu.dot_dimension_numbers<[1], [0], [0], [1], [0, 0, 1, 1], [], []>} : vector<8x8xf32>, vector<8x16xf32>, vector<8x16xf32> -> vector<8x16xf32>
      %c0_66 = arith.constant 0 : index
      %c0_67 = arith.constant 0 : index
      %78 = vector.load %arg12[%c0_66, %c0_67] : memref<8x16xf32, #tpu.memory_space<vmem>>, vector<8x16xf32>
      %cst_68 = arith.constant dense<0.000000e+00> : vector<8x16xf32>
      %79 = tpu.matmul %37, %78, %cst_68 {dimension_numbers = #tpu.dot_dimension_numbers<[1], [0], [0], [1], [0, 0, 1, 1], [], []>} : vector<8x8xf32>, vector<8x16xf32>, vector<8x16xf32> -> vector<8x16xf32>
      %80 = arith.addf %77, %79 : vector<8x16xf32>
      %c0_69 = arith.constant 0 : index
      %c0_70 = arith.constant 0 : index
      %81 = vector.load %arg13[%c0_69, %c0_70] : memref<1x16xf32, #tpu.memory_space<vmem>>, vector<1x16xf32>
      %82 = vector.broadcast %81 : vector<1x16xf32> to vector<8x16xf32>
      %83 = arith.addf %80, %82 : vector<8x16xf32>
      %cst_71 = arith.constant 0.000000e+00 : f32
      %84 = vector.broadcast %cst_71 : f32 to vector<8x16xf32>
      %85 = arith.maximumf %83, %84 : vector<8x16xf32>
      %c0_72 = arith.constant 0 : index
      %c0_73 = arith.constant 0 : index
      %86 = vector.load %arg14[%c0_72, %c0_73] : memref<16x2xf32, #tpu.memory_space<vmem>>, vector<16x2xf32>
      %cst_74 = arith.constant dense<0.000000e+00> : vector<8x2xf32>
      %87 = tpu.matmul %85, %86, %cst_74 {dimension_numbers = #tpu.dot_dimension_numbers<[1], [0], [0], [1], [0, 0, 1, 1], [], []>} : vector<8x16xf32>, vector<16x2xf32>, vector<8x2xf32> -> vector<8x2xf32>
      %c0_75 = arith.constant 0 : index
      %c0_76 = arith.constant 0 : index
      %88 = vector.load %arg15[%c0_75, %c0_76] : memref<1x2xf32, #tpu.memory_space<vmem>>, vector<1x2xf32>
      %89 = vector.broadcast %88 : vector<1x2xf32> to vector<8x2xf32>
      %90 = arith.addf %87, %89 : vector<8x2xf32>
      %cst_77 = arith.constant dense<0xFF800000> : vector<8xf32>
      %91 = vector.multi_reduction <maximumf>, %90, %cst_77 [1] : vector<8x2xf32> to vector<8xf32>
      %92 = vector.shape_cast %91 : vector<8xf32> to vector<8x1xf32>
      %93 = vector.broadcast %92 : vector<8x1xf32> to vector<8x2xf32>
      %94 = arith.subf %90, %93 : vector<8x2xf32>
      %95 = math.exp %94 : vector<8x2xf32>
      %cst_78 = arith.constant dense<0.000000e+00> : vector<8xf32>
      %96 = vector.multi_reduction <add>, %95, %cst_78 [1] : vector<8x2xf32> to vector<8xf32>
      %97 = vector.shape_cast %96 : vector<8xf32> to vector<8x1xf32>
      %98 = vector.broadcast %97 : vector<8x1xf32> to vector<8x2xf32>
      %99 = arith.divf %95, %98 : vector<8x2xf32>
      %c0_79 = arith.constant 0 : index
      %c0_80 = arith.constant 0 : index
      %100 = vector.load %arg16[%c0_79, %c0_80] : memref<8x128xf32, #tpu.memory_space<vmem>>, vector<8x128xf32>
      %101 = vector.extract_strided_slice %99 {offsets = [0, 0], sizes = [8, 1], strides = [1, 1]} : vector<8x2xf32> to vector<8x1xf32>
      %102 = vector.broadcast %101 : vector<8x1xf32> to vector<8x128xf32>
      %103 = arith.mulf %102, %100 : vector<8x128xf32>
      %104 = vector.extract_strided_slice %99 {offsets = [0, 1], sizes = [8, 1], strides = [1, 1]} : vector<8x2xf32> to vector<8x1xf32>
      %105 = vector.broadcast %104 : vector<8x1xf32> to vector<8x128xf32>
      %106 = arith.mulf %105, %100 : vector<8x128xf32>
      %cst_81 = arith.constant dense<0.000000e+00> : vector<8x128xf32>
      %107 = tpu.matmul %75, %103, %cst_81 {dimension_numbers = #tpu.dot_dimension_numbers<[1], [0], [0], [1], [0, 0, 1, 1], [], []>} : vector<8x8xf32>, vector<8x128xf32>, vector<8x128xf32> -> vector<8x128xf32>
      %cst_82 = arith.constant dense<0.000000e+00> : vector<8x128xf32>
      %108 = tpu.matmul %37, %106, %cst_82 {dimension_numbers = #tpu.dot_dimension_numbers<[1], [0], [0], [1], [0, 0, 1, 1], [], []>} : vector<8x8xf32>, vector<8x128xf32>, vector<8x128xf32> -> vector<8x128xf32>
      %109 = arith.addf %107, %108 : vector<8x128xf32>
      %c0_83 = arith.constant 0 : index
      %c0_84 = arith.constant 0 : index
      %110 = vector.load %arg17[%c0_83, %c0_84] : memref<1x128xf32, #tpu.memory_space<vmem>>, vector<1x128xf32>
      %111 = vector.broadcast %110 : vector<1x128xf32> to vector<8x128xf32>
      %112 = arith.addf %109, %111 : vector<8x128xf32>
      %c0_85 = arith.constant 0 : index
      %c0_86 = arith.constant 0 : index
      %113 = vector.load %arg18[%c0_85, %c0_86] : memref<8x128xf32, #tpu.memory_space<vmem>>, vector<8x128xf32>
      tpu.vector_store %arg18[%c0_85, %c0_86], %112 {strides = array<i32>} : memref<8x128xf32, #tpu.memory_space<vmem>>, vector<8x128xf32>,
    } else {
    }
    return
  }
  func.func @transform_0(%arg0: i32) -> (i32, i32, i32) {
    %c0_i32 = arith.constant 0 : i32
    %c0_i32_0 = arith.constant 0 : i32
    %c0_i32_1 = arith.constant 0 : i32
    return %c0_i32, %c0_i32_0, %arg0 : i32, i32, i32
  }
  func.func @transform_1(%arg0: i32) -> (i32, i32, i32) {
    %c0_i32 = arith.constant 0 : i32
    %c0_i32_0 = arith.constant 0 : i32
    %c0_i32_1 = arith.constant 0 : i32
    return %c0_i32, %c0_i32_0, %arg0 : i32, i32, i32
  }
  func.func @transform_2(%arg0: i32) -> (i32, i32, i32) {
    %c0_i32 = arith.constant 0 : i32
    %c0_i32_0 = arith.constant 0 : i32
    %c0_i32_1 = arith.constant 0 : i32
    return %c0_i32, %c0_i32_0, %arg0 : i32, i32, i32
  }
  func.func @transform_3(%arg0: i32) -> (i32, i32, i32) {
    %c0_i32 = arith.constant 0 : i32
    %c0_i32_0 = arith.constant 0 : i32
    %c0_i32_1 = arith.constant 0 : i32
    return %c0_i32, %c0_i32_0, %arg0 : i32, i32, i32
  }
  func.func @transform_4(%arg0: i32) -> (i32, i32) {
    %c0_i32 = arith.constant 0 : i32
    %c0_i32_0 = arith.constant 0 : i32
    %c0_i32_1 = arith.constant 0 : i32
    return %c0_i32, %c0_i32_0 : i32, i32
  }
  func.func @transform_5(%arg0: i32) -> (i32, i32) {
    %c0_i32 = arith.constant 0 : i32
    %c0_i32_0 = arith.constant 0 : i32
    %c0_i32_1 = arith.constant 0 : i32
    return %c0_i32, %c0_i32_0 : i32, i32
  }
  func.func @transform_6(%arg0: i32) -> (i32, i32) {
    %c0_i32 = arith.constant 0 : i32
    %c0_i32_0 = arith.constant 0 : i32
    %c0_i32_1 = arith.constant 0 : i32
    return %c0_i32, %c0_i32_0 : i32, i32
  }
  func.func @transform_7(%arg0: i32) -> (i32, i32) {
    %c0_i32 = arith.constant 0 : i32
    %c0_i32_0 = arith.constant 0 : i32
    %c0_i32_1 = arith.constant 0 : i32
    return %c0_i32, %c0_i32_0 : i32, i32
  }
  func.func @transform_8(%arg0: i32) -> (i32, i32) {
    %c0_i32 = arith.constant 0 : i32
    %c0_i32_0 = arith.constant 0 : i32
    %c0_i32_1 = arith.constant 0 : i32
    return %c0_i32, %c0_i32_0 : i32, i32
  }
  func.func @transform_9(%arg0: i32) -> (i32, i32) {
    %c0_i32 = arith.constant 0 : i32
    %c0_i32_0 = arith.constant 0 : i32
    %c0_i32_1 = arith.constant 0 : i32
    return %c0_i32, %c0_i32_0 : i32, i32
  }
  func.func @transform_10(%arg0: i32) -> (i32, i32) {
    %c0_i32 = arith.constant 0 : i32
    %c0_i32_0 = arith.constant 0 : i32
    %c0_i32_1 = arith.constant 0 : i32
    return %c0_i32, %c0_i32_0 : i32, i32
  }
  func.func @transform_11(%arg0: i32) -> (i32, i32) {
    %c0_i32 = arith.constant 0 : i32
    %c0_i32_0 = arith.constant 0 : i32
    %c0_i32_1 = arith.constant 0 : i32
    return %c0_i32, %c0_i32_0 : i32, i32
  }
  func.func @transform_12(%arg0: i32) -> (i32, i32) {
    %c0_i32 = arith.constant 0 : i32
    %c0_i32_0 = arith.constant 0 : i32
    %c0_i32_1 = arith.constant 0 : i32
    return %c0_i32, %c0_i32_0 : i32, i32
  }
  func.func @transform_13(%arg0: i32) -> (i32, i32) {
    %c0_i32 = arith.constant 0 : i32
    %c0_i32_0 = arith.constant 0 : i32
    %c0_i32_1 = arith.constant 0 : i32
    return %c0_i32, %c0_i32_0 : i32, i32
  }
  func.func @transform_14(%arg0: i32) -> (i32, i32) {
    %c0_i32 = arith.constant 0 : i32
    %c0_i32_0 = arith.constant 0 : i32
    %c0_i32_1 = arith.constant 0 : i32
    return %c0_i32, %c0_i32_0 : i32, i32
  }
  func.func @transform_15(%arg0: i32) -> (i32, i32) {
    %c0_i32 = arith.constant 0 : i32
    %c0_i32_0 = arith.constant 0 : i32
    %c0_i32_1 = arith.constant 0 : i32
    return %c0_i32, %c0_i32_0 : i32, i32
  }
  func.func @transform_16(%arg0: i32) -> (i32, i32) {
    %c0_i32 = arith.constant 0 : i32
    %c0_i32_0 = arith.constant 0 : i32
    %c0_i32_1 = arith.constant 0 : i32
    return %c0_i32, %c0_i32_0 : i32, i32
  }
  func.func @transform_17(%arg0: i32) -> (i32, i32) {
    %c0_i32 = arith.constant 0 : i32
    %c0_i32_0 = arith.constant 0 : i32
    %c0_i32_1 = arith.constant 0 : i32
    return %c0_i32, %c0_i32_0 : i32, i32
  }
}

</mosaic_0001>

<llo_original>
// kernel: tpu_custom_call.1
$region0: #{tpu_custom_call.1}
  #allocation0 [shape = 'u32[]', space=smem, size = 0x4, offset = 0x4, fixed_abs, tag = 'smem constant byte address 0x4 - core index']
  #allocation1 [shape = 'u32[144,128]{1,0:T(1,128)}', space=vmem, size = 0x12000, scoped, tag = 'internal scratch']
  #allocation2 [shape = 'f32[8,8]{1,0:T(8,128)}', space=vmem, size = 0x1000, scoped, tag = 'scratch operand']
  #allocation3 [shape = 'f32[8,8]{1,0:T(8,128)}', space=vmem, size = 0x1000, scoped, tag = 'scratch operand']
  #allocation4 [shape = 'f32[8,8]{1,0:T(8,128)}', space=vmem, size = 0x1000, scoped, tag = 'scratch operand']
  #allocation5 [shape = 'f32[8,8]{1,0:T(8,128)}', space=vmem, size = 0x1000, scoped, tag = 'scratch operand']
  %s0 = inlined_call_operand.hbm [shape: f32[8,8,2304], index: 0, kind: input, shape index: {}]
  %s1 = inlined_call_operand.hbm [shape: f32[8,8,2304], index: 1, kind: input, shape index: {}]
  %s2 = inlined_call_operand.hbm [shape: f32[8,8,2304], index: 2, kind: input, shape index: {}]
  %s3 = inlined_call_operand.hbm [shape: f32[8,8,2304], index: 3, kind: input, shape index: {}]
  %s4 = inlined_call_operand.vmem [shape: f32[8,8], index: 4, kind: input, shape index: {}]
  %s5 = inlined_call_operand.vmem [shape: f32[8,8], index: 5, kind: input, shape index: {}]
  %s6 = inlined_call_operand.vmem [shape: f32[8,8], index: 6, kind: input, shape index: {}]
  %s7 = inlined_call_operand.hbm [shape: f32[1,8], index: 7, kind: input, shape index: {}]
  %s8 = inlined_call_operand.vmem [shape: f32[8,8], index: 8, kind: input, shape index: {}]
  %s9 = inlined_call_operand.vmem [shape: f32[1,8], index: 9, kind: input, shape index: {}]
  %s10 = inlined_call_operand.hbm [shape: f32[8,16], index: 10, kind: input, shape index: {}]
  %s11 = inlined_call_operand.hbm [shape: f32[8,16], index: 11, kind: input, shape index: {}]
  %s12 = inlined_call_operand.hbm [shape: f32[1,16], index: 12, kind: input, shape index: {}]
  %s13 = inlined_call_operand.vmem [shape: f32[16,2], index: 13, kind: input, shape index: {}]
  %s14 = inlined_call_operand.vmem [shape: f32[1,2], index: 14, kind: input, shape index: {}]
  %s15 = inlined_call_operand.vmem [shape: f32[8,128], index: 15, kind: input, shape index: {}]
  %s16 = inlined_call_operand.vmem [shape: f32[1,128], index: 16, kind: input, shape index: {}]
  %s17 = inlined_call_operand.hbm [shape: f32[8,128], index: 17, kind: output, shape index: {}]
  %s18 = sld [smem:[#allocation0]]
  $region141: #{tpu_custom_call.1} parent=0
    _
  %s20 = ssub.s32 1, %s18
  %s21 = scalar_select 0, %s20, %s18
  $region1: #{tpu_custom_call.1} parent=0
    #allocation6 [shape = 'u8[393216]{0}', space=vmem, size = 0x60000, scoped, tag = 'input window, operand 0']
    #allocation7 [shape = 's32[2]{0}', space=sflag, size = 0x8, scoped, tag = 'scoped memory for tpu_custom_call.1']
    #allocation8 [shape = 's32[2]{0}', space=sflag, size = 0x8, scoped, tag = 'scoped memory for tpu_custom_call.1']
    #allocation9 [shape = 'u8[393216]{0}', space=vmem, size = 0x60000, scoped, tag = 'input window, operand 1']
    #allocation10 [shape = 's32[2]{0}', space=sflag, size = 0x8, scoped, tag = 'scoped memory for tpu_custom_call.1']
    #allocation11 [shape = 'u8[393216]{0}', space=vmem, size = 0x60000, scoped, tag = 'input window, operand 2']
    #allocation12 [shape = 'u8[393216]{0}', space=vmem, size = 0x60000, scoped, tag = 'input window, operand 3']
    #allocation13 [shape = 's32[2]{0}', space=sflag, size = 0x8, scoped, tag = 'scoped memory for tpu_custom_call.1']
    #allocation14 [shape = 'u8[512]{0}', space=vmem, size = 0x400, scoped, tag = 'input window, operand 7, single buffered']
    #allocation15 [shape = 'u8[4096]{0}', space=vmem, size = 0x1000, scoped, tag = 'input window, operand 10, single buffered']
    #allocation16 [shape = 's32[1]{0}', space=sflag, size = 0x4, scoped, tag = 'scoped memory for tpu_custom_call.1']
    #allocation17 [shape = 'u8[4096]{0}', space=vmem, size = 0x1000, scoped, tag = 'input window, operand 11, single buffered']
    #allocation18 [shape = 'u8[512]{0}', space=vmem, size = 0x400, scoped, tag = 'input window, operand 12, single buffered']
    #allocation19 [shape = 's32[1]{0}', space=sflag, size = 0x4, scoped, tag = 'scoped memory for tpu_custom_call.1']
    #allocation20 [shape = 'u8[4096]{0}', space=vmem, size = 0x1000, scoped, tag = 'output window, operand 0, single buffered']
    %22 = vsyncpa [#allocation7], 0
    %s23 = scalar_lea.sflag [#allocation7], 1
    %24 = vsyncpa %s23, 0
    %25 = vsyncpa [#allocation10], 0
    %s26 = scalar_lea.sflag [#allocation10], 1
    %27 = vsyncpa %s26, 0
    %28 = vsyncpa [#allocation13], 0
    %s29 = scalar_lea.sflag [#allocation13], 1
    %30 = vsyncpa %s29, 0
    %31 = vsyncpa [#allocation16], 0
    %32 = vsyncpa [#allocation19], 0
    %33 = vsyncpa [#allocation8], 0
    loop: start=0, step=1, limit=5
    $region2: #{tpu_custom_call.1} parent=1 // loop_pre_header
      _
    $region3: #{tpu_custom_call.1} parent=1 // loop_header
      %s35 = sphi 0, %s39
      %p36 = scmp.ge.s32.totalorder %s35, 5
      %s45 = sphi 0, %s47
      %s48 = sphi 0, %s45
      %s49 = sphi 0, %s48
      %s65 = sphi 0, %s49
      %s71 = sphi 0, %s73
      %s74 = sphi 0, %s71
      %s75 = sphi 0, %s74
      %s91 = sphi 0, %s75
      %s97 = sphi 0, %s99
      %s100 = sphi 0, %s97
      %s101 = sphi 0, %s100
      %s117 = sphi 0, %s101
      %s123 = sphi 0, %s125
      %s126 = sphi 0, %s123
      %s127 = sphi 0, %s126
      %s143 = sphi 0, %s127
      %s147 = sphi 0, %s147
      %s149 = sphi 0, %s147
      %s150 = sphi 0, %s149
      %s164 = sphi 0, %s150
      %s168 = sphi 0, %s168
      %s170 = sphi 0, %s168
      %s171 = sphi 0, %s170
      %s185 = sphi 0, %s171
      %s189 = sphi 0, %s189
      %s191 = sphi 0, %s189
      %s192 = sphi 0, %s191
      %s206 = sphi 0, %s192
      %s210 = sphi 0, %s210
      %s212 = sphi 0, %s210
      %s213 = sphi 0, %s212
      %s227 = sphi 0, %s213
      %s231 = sphi 0, %s231
      %s233 = sphi 0, %s231
      %s234 = sphi 0, %s233
      %s248 = sphi 0, %s234
      %s252 = sphi 0, %s252
      %s254 = sphi 0, %s252
      %s255 = sphi 0, %s254
      %s269 = sphi 0, %s255
      %s273 = sphi 0, %s273
      %s275 = sphi 0, %s273
      %s276 = sphi 0, %s275
      %s290 = sphi 0, %s276
      %s294 = sphi 0, %s294
      %s296 = sphi 0, %s294
      %s297 = sphi 0, %s296
      %s311 = sphi 0, %s297
      %s315 = sphi 0, %s315
      %s317 = sphi 0, %s315
      %s318 = sphi 0, %s317
      %s332 = sphi 0, %s318
      %s336 = sphi 0, %s336
      %s338 = sphi 0, %s336
      %s339 = sphi 0, %s338
      %s353 = sphi 0, %s339
      %s357 = sphi 0, %s357
      %s359 = sphi 0, %s357
      %s360 = sphi 0, %s359
      %s374 = sphi 0, %s360
      %s378 = sphi 0, %s378
      %s380 = sphi 0, %s378
      %s381 = sphi 0, %s380
      %s395 = sphi 0, %s381
      %s399 = sphi 0, %s399
      %s401 = sphi 0, %s399
      %s402 = sphi 0, %s401
      %s416 = sphi 0, %s402
      %s420 = sphi 0, %s420
      %s422 = sphi 0, %s420
      %s423 = sphi 0, %s422
      %s437 = sphi 0, %s423
    $region4: #{tpu_custom_call.1} parent=1 // loop_header_branch
      %38 = sbr.rel (%p36) target = $region8
    $region5: #{tpu_custom_call.1} parent=1 // loop_body
      %s40 = ssub.s32 %s35, 1
      %s41 = ssub.s32 %s35, 2
      %s42 = sadd.s32 %s35, 1
      %s43 = ssub.s32 %s35, %s42
      %p44 = scmp.eq.s32.totalorder %s43, 0
      %s46 = sadd.s32 %s45, 1
      %s47 = scalar_select %p44, %s45, %s46
      %p50 = pneg %p44
      %p51 = scmp.eq.s32.totalorder %s35, 2
      %p52 = por %p50, %p51
      %p53 = scmp.ne.s32.totalorder %s45, %s48
      %p54 = scmp.eq.s32.totalorder %s35, 0
      %p55 = por %p53, %p54
      %p56 = scmp.ne.s32.totalorder %s45, %s48
      %p57 = scmp.eq.s32.totalorder %s40, 2
      %p58 = por %p56, %p57
      %p59 = scmp.ne.s32.totalorder %s48, %s49
      %p60 = scmp.eq.s32.totalorder %s40, 0
      %p61 = por %p59, %p60
      %p62 = scmp.ne.s32.totalorder %s48, %s49
      %p63 = scmp.eq.s32.totalorder %s41, 2
      %p64 = por %p62, %p63
      %p66 = scmp.ne.s32.totalorder %s49, %s65
      %p67 = scmp.eq.s32.totalorder %s41, 0
      %p68 = por %p66, %p67
      %s69 = ssub.s32 %s35, %s42
      %p70 = scmp.eq.s32.totalorder %s69, 0
      %s72 = sadd.s32 %s71, 1
      %s73 = scalar_select %p70, %s71, %s72
      %p76 = pneg %p70
      %p77 = scmp.eq.s32.totalorder %s35, 2
      %p78 = por %p76, %p77
      %p79 = scmp.ne.s32.totalorder %s71, %s74
      %p80 = scmp.eq.s32.totalorder %s35, 0
      %p81 = por %p79, %p80
      %p82 = scmp.ne.s32.totalorder %s71, %s74
      %p83 = scmp.eq.s32.totalorder %s40, 2
      %p84 = por %p82, %p83
      %p85 = scmp.ne.s32.totalorder %s74, %s75
      %p86 = scmp.eq.s32.totalorder %s40, 0
      %p87 = por %p85, %p86
      %p88 = scmp.ne.s32.totalorder %s74, %s75
      %p89 = scmp.eq.s32.totalorder %s41, 2
      %p90 = por %p88, %p89
      %p92 = scmp.ne.s32.totalorder %s75, %s91
      %p93 = scmp.eq.s32.totalorder %s41, 0
      %p94 = por %p92, %p93
      %s95 = ssub.s32 %s35, %s42
      %p96 = scmp.eq.s32.totalorder %s95, 0
      %s98 = sadd.s32 %s97, 1
      %s99 = scalar_select %p96, %s97, %s98
      %p102 = pneg %p96
      %p103 = scmp.eq.s32.totalorder %s35, 2
      %p104 = por %p102, %p103
      %p105 = scmp.ne.s32.totalorder %s97, %s100
      %p106 = scmp.eq.s32.totalorder %s35, 0
      %p107 = por %p105, %p106
      %p108 = scmp.ne.s32.totalorder %s97, %s100
      %p109 = scmp.eq.s32.totalorder %s40, 2
      %p110 = por %p108, %p109
      %p111 = scmp.ne.s32.totalorder %s100, %s101
      %p112 = scmp.eq.s32.totalorder %s40, 0
      %p113 = por %p111, %p112
      %p114 = scmp.ne.s32.totalorder %s100, %s101
      %p115 = scmp.eq.s32.totalorder %s41, 2
      %p116 = por %p114, %p115
      %p118 = scmp.ne.s32.totalorder %s101, %s117
      %p119 = scmp.eq.s32.totalorder %s41, 0
      %p120 = por %p118, %p119
      %s121 = ssub.s32 %s35, %s42
      %p122 = scmp.eq.s32.totalorder %s121, 0
      %s124 = sadd.s32 %s123, 1
      %s125 = scalar_select %p122, %s123, %s124
      %p128 = pneg %p122
      %p129 = scmp.eq.s32.totalorder %s35, 2
      %p130 = por %p128, %p129
      %p131 = scmp.ne.s32.totalorder %s123, %s126
      %p132 = scmp.eq.s32.totalorder %s35, 0
      %p133 = por %p131, %p132
      %p134 = scmp.ne.s32.totalorder %s123, %s126
      %p135 = scmp.eq.s32.totalorder %s40, 2
      %p136 = por %p134, %p135
      %p137 = scmp.ne.s32.totalorder %s126, %s127
      %p138 = scmp.eq.s32.totalorder %s40, 0
      %p139 = por %p137, %p138
      %p140 = scmp.ne.s32.totalorder %s126, %s127
      %p141 = scmp.eq.s32.totalorder %s41, 2
      %p142 = por %p140, %p141
      %p144 = scmp.ne.s32.totalorder %s127, %s143
      %p145 = scmp.eq.s32.totalorder %s41, 0
      %p146 = por %p144, %p145
      %s148 = sadd.s32 %s147, 1
      %p151 = scmp.eq.s32.totalorder %s35, 2
      %p152 = scmp.ne.s32.totalorder %s147, %s149
      %p153 = scmp.eq.s32.totalorder %s35, 0
      %p154 = por %p152, %p153
      %p155 = scmp.ne.s32.totalorder %s147, %s149
      %p156 = scmp.eq.s32.totalorder %s40, 2
      %p157 = por %p155, %p156
      %p158 = scmp.ne.s32.totalorder %s149, %s150
      %p159 = scmp.eq.s32.totalorder %s40, 0
      %p160 = por %p158, %p159
      %p161 = scmp.ne.s32.totalorder %s149, %s150
      %p162 = scmp.eq.s32.totalorder %s41, 2
      %p163 = por %p161, %p162
      %p165 = scmp.ne.s32.totalorder %s150, %s164
      %p166 = scmp.eq.s32.totalorder %s41, 0
      %p167 = por %p165, %p166
      %s169 = sadd.s32 %s168, 1
      %p172 = scmp.eq.s32.totalorder %s35, 2
      %p173 = scmp.ne.s32.totalorder %s168, %s170
      %p174 = scmp.eq.s32.totalorder %s35, 0
      %p175 = por %p173, %p174
      %p176 = scmp.ne.s32.totalorder %s168, %s170
      %p177 = scmp.eq.s32.totalorder %s40, 2
      %p178 = por %p176, %p177
      %p179 = scmp.ne.s32.totalorder %s170, %s171
      %p180 = scmp.eq.s32.totalorder %s40, 0
      %p181 = por %p179, %p180
      %p182 = scmp.ne.s32.totalorder %s170, %s171
      %p183 = scmp.eq.s32.totalorder %s41, 2
      %p184 = por %p182, %p183
      %p186 = scmp.ne.s32.totalorder %s171, %s185
      %p187 = scmp.eq.s32.totalorder %s41, 0
      %p188 = por %p186, %p187
      %s190 = sadd.s32 %s189, 1
      %p193 = scmp.eq.s32.totalorder %s35, 2
      %p194 = scmp.ne.s32.totalorder %s189, %s191
      %p195 = scmp.eq.s32.totalorder %s35, 0
      %p196 = por %p194, %p195
      %p197 = scmp.ne.s32.totalorder %s189, %s191
      %p198 = scmp.eq.s32.totalorder %s40, 2
      %p199 = por %p197, %p198
      %p200 = scmp.ne.s32.totalorder %s191, %s192
      %p201 = scmp.eq.s32.totalorder %s40, 0
      %p202 = por %p200, %p201
      %p203 = scmp.ne.s32.totalorder %s191, %s192
      %p204 = scmp.eq.s32.totalorder %s41, 2
      %p205 = por %p203, %p204
      %p207 = scmp.ne.s32.totalorder %s192, %s206
      %p208 = scmp.eq.s32.totalorder %s41, 0
      %p209 = por %p207, %p208
      %s211 = sadd.s32 %s210, 1
      %p214 = scmp.eq.s32.totalorder %s35, 2
      %p215 = scmp.ne.s32.totalorder %s210, %s212
      %p216 = scmp.eq.s32.totalorder %s35, 0
      %p217 = por %p215, %p216
      %p218 = scmp.ne.s32.totalorder %s210, %s212
      %p219 = scmp.eq.s32.totalorder %s40, 2
      %p220 = por %p218, %p219
      %p221 = scmp.ne.s32.totalorder %s212, %s213
      %p222 = scmp.eq.s32.totalorder %s40, 0
      %p223 = por %p221, %p222
      %p224 = scmp.ne.s32.totalorder %s212, %s213
      %p225 = scmp.eq.s32.totalorder %s41, 2
      %p226 = por %p224, %p225
      %p228 = scmp.ne.s32.totalorder %s213, %s227
      %p229 = scmp.eq.s32.totalorder %s41, 0
      %p230 = por %p228, %p229
      %s232 = sadd.s32 %s231, 1
      %p235 = scmp.eq.s32.totalorder %s35, 2
      %p236 = scmp.ne.s32.totalorder %s231, %s233
      %p237 = scmp.eq.s32.totalorder %s35, 0
      %p238 = por %p236, %p237
      %p239 = scmp.ne.s32.totalorder %s231, %s233
      %p240 = scmp.eq.s32.totalorder %s40, 2
      %p241 = por %p239, %p240
      %p242 = scmp.ne.s32.totalorder %s233, %s234
      %p243 = scmp.eq.s32.totalorder %s40, 0
      %p244 = por %p242, %p243
      %p245 = scmp.ne.s32.totalorder %s233, %s234
      %p246 = scmp.eq.s32.totalorder %s41, 2
      %p247 = por %p245, %p246
      %p249 = scmp.ne.s32.totalorder %s234, %s248
      %p250 = scmp.eq.s32.totalorder %s41, 0
      %p251 = por %p249, %p250
      %s253 = sadd.s32 %s252, 1
      %p256 = scmp.eq.s32.totalorder %s35, 2
      %p257 = scmp.ne.s32.totalorder %s252, %s254
      %p258 = scmp.eq.s32.totalorder %s35, 0
      %p259 = por %p257, %p258
      %p260 = scmp.ne.s32.totalorder %s252, %s254
      %p261 = scmp.eq.s32.totalorder %s40, 2
      %p262 = por %p260, %p261
      %p263 = scmp.ne.s32.totalorder %s254, %s255
      %p264 = scmp.eq.s32.totalorder %s40, 0
      %p265 = por %p263, %p264
      %p266 = scmp.ne.s32.totalorder %s254, %s255
      %p267 = scmp.eq.s32.totalorder %s41, 2
      %p268 = por %p266, %p267
      %p270 = scmp.ne.s32.totalorder %s255, %s269
      %p271 = scmp.eq.s32.totalorder %s41, 0
      %p272 = por %p270, %p271
      %s274 = sadd.s32 %s273, 1
      %p277 = scmp.eq.s32.totalorder %s35, 2
      %p278 = scmp.ne.s32.totalorder %s273, %s275
      %p279 = scmp.eq.s32.totalorder %s35, 0
      %p280 = por %p278, %p279
      %p281 = scmp.ne.s32.totalorder %s273, %s275
      %p282 = scmp.eq.s32.totalorder %s40, 2
      %p283 = por %p281, %p282
      %p284 = scmp.ne.s32.totalorder %s275, %s276
      %p285 = scmp.eq.s32.totalorder %s40, 0
      %p286 = por %p284, %p285
      %p287 = scmp.ne.s32.totalorder %s275, %s276
      %p288 = scmp.eq.s32.totalorder %s41, 2
      %p289 = por %p287, %p288
      %p291 = scmp.ne.s32.totalorder %s276, %s290
      %p292 = scmp.eq.s32.totalorder %s41, 0
      %p293 = por %p291, %p292
      %s295 = sadd.s32 %s294, 1
      %p298 = scmp.eq.s32.totalorder %s35, 2
      %p299 = scmp.ne.s32.totalorder %s294, %s296
      %p300 = scmp.eq.s32.totalorder %s35, 0
      %p301 = por %p299, %p300
      %p302 = scmp.ne.s32.totalorder %s294, %s296
      %p303 = scmp.eq.s32.totalorder %s40, 2
      %p304 = por %p302, %p303
      %p305 = scmp.ne.s32.totalorder %s296, %s297
      %p306 = scmp.eq.s32.totalorder %s40, 0
      %p307 = por %p305, %p306
      %p308 = scmp.ne.s32.totalorder %s296, %s297
      %p309 = scmp.eq.s32.totalorder %s41, 2
      %p310 = por %p308, %p309
      %p312 = scmp.ne.s32.totalorder %s297, %s311
      %p313 = scmp.eq.s32.totalorder %s41, 0
      %p314 = por %p312, %p313
      %s316 = sadd.s32 %s315, 1
      %p319 = scmp.eq.s32.totalorder %s35, 2
      %p320 = scmp.ne.s32.totalorder %s315, %s317
      %p321 = scmp.eq.s32.totalorder %s35, 0
      %p322 = por %p320, %p321
      %p323 = scmp.ne.s32.totalorder %s315, %s317
      %p324 = scmp.eq.s32.totalorder %s40, 2
      %p325 = por %p323, %p324
      %p326 = scmp.ne.s32.totalorder %s317, %s318
      %p327 = scmp.eq.s32.totalorder %s40, 0
      %p328 = por %p326, %p327
      %p329 = scmp.ne.s32.totalorder %s317, %s318
      %p330 = scmp.eq.s32.totalorder %s41, 2
      %p331 = por %p329, %p330
      %p333 = scmp.ne.s32.totalorder %s318, %s332
      %p334 = scmp.eq.s32.totalorder %s41, 0
      %p335 = por %p333, %p334
      %s337 = sadd.s32 %s336, 1
      %p340 = scmp.eq.s32.totalorder %s35, 2
      %p341 = scmp.ne.s32.totalorder %s336, %s338
      %p342 = scmp.eq.s32.totalorder %s35, 0
      %p343 = por %p341, %p342
      %p344 = scmp.ne.s32.totalorder %s336, %s338
      %p345 = scmp.eq.s32.totalorder %s40, 2
      %p346 = por %p344, %p345
      %p347 = scmp.ne.s32.totalorder %s338, %s339
      %p348 = scmp.eq.s32.totalorder %s40, 0
      %p349 = por %p347, %p348
      %p350 = scmp.ne.s32.totalorder %s338, %s339
      %p351 = scmp.eq.s32.totalorder %s41, 2
      %p352 = por %p350, %p351
      %p354 = scmp.ne.s32.totalorder %s339, %s353
      %p355 = scmp.eq.s32.totalorder %s41, 0
      %p356 = por %p354, %p355
      %s358 = sadd.s32 %s357, 1
      %p361 = scmp.eq.s32.totalorder %s35, 2
      %p362 = scmp.ne.s32.totalorder %s357, %s359
      %p363 = scmp.eq.s32.totalorder %s35, 0
      %p364 = por %p362, %p363
      %p365 = scmp.ne.s32.totalorder %s357, %s359
      %p366 = scmp.eq.s32.totalorder %s40, 2
      %p367 = por %p365, %p366
      %p368 = scmp.ne.s32.totalorder %s359, %s360
      %p369 = scmp.eq.s32.totalorder %s40, 0
      %p370 = por %p368, %p369
      %p371 = scmp.ne.s32.totalorder %s359, %s360
      %p372 = scmp.eq.s32.totalorder %s41, 2
      %p373 = por %p371, %p372
      %p375 = scmp.ne.s32.totalorder %s360, %s374
      %p376 = scmp.eq.s32.totalorder %s41, 0
      %p377 = por %p375, %p376
      %s379 = sadd.s32 %s378, 1
      %p382 = scmp.eq.s32.totalorder %s35, 2
      %p383 = scmp.ne.s32.totalorder %s378, %s380
      %p384 = scmp.eq.s32.totalorder %s35, 0
      %p385 = por %p383, %p384
      %p386 = scmp.ne.s32.totalorder %s378, %s380
      %p387 = scmp.eq.s32.totalorder %s40, 2
      %p388 = por %p386, %p387
      %p389 = scmp.ne.s32.totalorder %s380, %s381
      %p390 = scmp.eq.s32.totalorder %s40, 0
      %p391 = por %p389, %p390
      %p392 = scmp.ne.s32.totalorder %s380, %s381
      %p393 = scmp.eq.s32.totalorder %s41, 2
      %p394 = por %p392, %p393
      %p396 = scmp.ne.s32.totalorder %s381, %s395
      %p397 = scmp.eq.s32.totalorder %s41, 0
      %p398 = por %p396, %p397
      %s400 = sadd.s32 %s399, 1
      %p403 = scmp.eq.s32.totalorder %s35, 2
      %p404 = scmp.ne.s32.totalorder %s399, %s401
      %p405 = scmp.eq.s32.totalorder %s35, 0
      %p406 = por %p404, %p405
      %p407 = scmp.ne.s32.totalorder %s399, %s401
      %p408 = scmp.eq.s32.totalorder %s40, 2
      %p409 = por %p407, %p408
      %p410 = scmp.ne.s32.totalorder %s401, %s402
      %p411 = scmp.eq.s32.totalorder %s40, 0
      %p412 = por %p410, %p411
      %p413 = scmp.ne.s32.totalorder %s401, %s402
      %p414 = scmp.eq.s32.totalorder %s41, 2
      %p415 = por %p413, %p414
      %p417 = scmp.ne.s32.totalorder %s402, %s416
      %p418 = scmp.eq.s32.totalorder %s41, 0
      %p419 = por %p417, %p418
      %s421 = sadd.s32 %s420, 1
      %p424 = scmp.eq.s32.totalorder %s35, 2
      %p425 = scmp.ne.s32.totalorder %s420, %s422
      %p426 = scmp.eq.s32.totalorder %s35, 0
      %p427 = por %p425, %p426
      %p428 = scmp.ne.s32.totalorder %s420, %s422
      %p429 = scmp.eq.s32.totalorder %s40, 2
      %p430 = por %p428, %p429
      %p431 = scmp.ne.s32.totalorder %s422, %s423
      %p432 = scmp.eq.s32.totalorder %s40, 0
      %p433 = por %p431, %p432
      %p434 = scmp.ne.s32.totalorder %s422, %s423
      %p435 = scmp.eq.s32.totalorder %s41, 2
      %p436 = por %p434, %p435
      %p438 = scmp.ne.s32.totalorder %s423, %s437
      %p439 = scmp.eq.s32.totalorder %s41, 0
      %p440 = por %p438, %p439
      %p441 = scmp.le.s32.totalorder 1, %s35
      %p442 = scmp.lt.s32.totalorder %s35, 4
      %p443 = pnand %p441, %p442
      %p444 = pneg %p443
      // Predicated region
      $region9: #{tpu_custom_call.1} parent=5 // pred_check
        _
      $region10: #{tpu_custom_call.1} parent=5 // pred_check_branch
        %446 = sbr.rel (%p443) target = $region12
      $region11: #{tpu_custom_call.1} parent=5 // pred_region
        %s447 = ssub.s32 %s35, 1
        // Predicated region
        $region13: #{tpu_custom_call.1} parent=11 // pred_check
          %p448 = pneg %p160
        $region14: #{tpu_custom_call.1} parent=11 // pred_check_branch
          %450 = sbr.rel (%p448) target = $region16
        $region15: #{tpu_custom_call.1} parent=11 // pred_region
          _
        $region16: #{tpu_custom_call.1} parent=11 // pred_fallthru
          _
        // Predicated region
        $region17: #{tpu_custom_call.1} parent=11 // pred_check
          %p451 = pneg %p181
        $region18: #{tpu_custom_call.1} parent=11 // pred_check_branch
          %453 = sbr.rel (%p451) target = $region20
        $region19: #{tpu_custom_call.1} parent=11 // pred_region
          _
        $region20: #{tpu_custom_call.1} parent=11 // pred_fallthru
          _
        // Predicated region
        $region21: #{tpu_custom_call.1} parent=11 // pred_check
          %p454 = pneg %p202
        $region22: #{tpu_custom_call.1} parent=11 // pred_check_branch
          %456 = sbr.rel (%p454) target = $region24
        $region23: #{tpu_custom_call.1} parent=11 // pred_region
          _
        $region24: #{tpu_custom_call.1} parent=11 // pred_fallthru
          _
        // Predicated region
        $region25: #{tpu_custom_call.1} parent=11 // pred_check
          %p457 = pneg %p223
        $region26: #{tpu_custom_call.1} parent=11 // pred_check_branch
          %459 = sbr.rel (%p457) target = $region28
        $region27: #{tpu_custom_call.1} parent=11 // pred_region
          %s461 = ssub.s32 16, 16
          %462 = vsyncadd [#allocation13], %s461
          %s464 = sshll.u32 [#allocation14], 4
          %s465 = int_to_ptr.vmem [resolvable:$true] %s464
          %467 = dma.hbm_to_vmem [thread:$0]  %s7, 16, %s465, [#allocation13]
        $region28: #{tpu_custom_call.1} parent=11 // pred_fallthru
          _
        // Predicated region
        $region29: #{tpu_custom_call.1} parent=11 // pred_check
          %p468 = pneg %p244
        $region30: #{tpu_custom_call.1} parent=11 // pred_check_branch
          %470 = sbr.rel (%p468) target = $region32
        $region31: #{tpu_custom_call.1} parent=11 // pred_region
          _
        $region32: #{tpu_custom_call.1} parent=11 // pred_fallthru
          _
        // Predicated region
        $region33: #{tpu_custom_call.1} parent=11 // pred_check
          %p471 = pneg %p265
        $region34: #{tpu_custom_call.1} parent=11 // pred_check_branch
          %473 = sbr.rel (%p471) target = $region36
        $region35: #{tpu_custom_call.1} parent=11 // pred_region
          _
        $region36: #{tpu_custom_call.1} parent=11 // pred_fallthru
          _
        // Predicated region
        $region37: #{tpu_custom_call.1} parent=11 // pred_check
          %p474 = pneg %p286
        $region38: #{tpu_custom_call.1} parent=11 // pred_check_branch
          %476 = sbr.rel (%p474) target = $region40
        $region39: #{tpu_custom_call.1} parent=11 // pred_region
          %s478 = ssub.s32 128, 128
          %479 = vsyncadd [#allocation16], %s478
          %s481 = sshll.u32 [#allocation15], 4
          %s482 = int_to_ptr.vmem [resolvable:$true] %s481
          %484 = dma.hbm_to_vmem [thread:$0]  %s10, 128, %s482, [#allocation16]
        $region40: #{tpu_custom_call.1} parent=11 // pred_fallthru
          _
        // Predicated region
        $region41: #{tpu_custom_call.1} parent=11 // pred_check
          %p485 = pneg %p307
        $region42: #{tpu_custom_call.1} parent=11 // pred_check_branch
          %487 = sbr.rel (%p485) target = $region44
        $region43: #{tpu_custom_call.1} parent=11 // pred_region
          %s489 = ssub.s32 128, 128
          %490 = vsyncadd [#allocation16], %s489
          %s492 = sshll.u32 [#allocation17], 4
          %s493 = int_to_ptr.vmem [resolvable:$true] %s492
          %495 = dma.hbm_to_vmem [thread:$0]  %s11, 128, %s493, [#allocation16]
        $region44: #{tpu_custom_call.1} parent=11 // pred_fallthru
          _
        // Predicated region
        $region45: #{tpu_custom_call.1} parent=11 // pred_check
          %p496 = pneg %p328
        $region46: #{tpu_custom_call.1} parent=11 // pred_check_branch
          %498 = sbr.rel (%p496) target = $region48
        $region47: #{tpu_custom_call.1} parent=11 // pred_region
          %s500 = ssub.s32 16, 16
          %501 = vsyncadd [#allocation19], %s500
          %s503 = sshll.u32 [#allocation18], 4
          %s504 = int_to_ptr.vmem [resolvable:$true] %s503
          %506 = dma.hbm_to_vmem [thread:$0]  %s12, 16, %s504, [#allocation19]
        $region48: #{tpu_custom_call.1} parent=11 // pred_fallthru
          _
        // Predicated region
        $region49: #{tpu_custom_call.1} parent=11 // pred_check
          %p507 = pneg %p349
        $region50: #{tpu_custom_call.1} parent=11 // pred_check_branch
          %509 = sbr.rel (%p507) target = $region52
        $region51: #{tpu_custom_call.1} parent=11 // pred_region
          _
        $region52: #{tpu_custom_call.1} parent=11 // pred_fallthru
          _
        // Predicated region
        $region53: #{tpu_custom_call.1} parent=11 // pred_check
          %p510 = pneg %p370
        $region54: #{tpu_custom_call.1} parent=11 // pred_check_branch
          %512 = sbr.rel (%p510) target = $region56
        $region55: #{tpu_custom_call.1} parent=11 // pred_region
          _
        $region56: #{tpu_custom_call.1} parent=11 // pred_fallthru
          _
        // Predicated region
        $region57: #{tpu_custom_call.1} parent=11 // pred_check
          %p513 = pneg %p391
        $region58: #{tpu_custom_call.1} parent=11 // pred_check_branch
          %515 = sbr.rel (%p513) target = $region60
        $region59: #{tpu_custom_call.1} parent=11 // pred_region
          _
        $region60: #{tpu_custom_call.1} parent=11 // pred_fallthru
          _
        // Predicated region
        $region61: #{tpu_custom_call.1} parent=11 // pred_check
          %p516 = pneg %p412
        $region62: #{tpu_custom_call.1} parent=11 // pred_check_branch
          %518 = sbr.rel (%p516) target = $region64
        $region63: #{tpu_custom_call.1} parent=11 // pred_region
          _
        $region64: #{tpu_custom_call.1} parent=11 // pred_fallthru
          _
      $region12: #{tpu_custom_call.1} parent=5 // pred_fallthru
        _
      %p519 = scmp.lt.s32.totalorder %s35, 3
      // Predicated region
      $region65: #{tpu_custom_call.1} parent=5 // pred_check
        %p520 = pneg %p519
      $region66: #{tpu_custom_call.1} parent=5 // pred_check_branch
        %522 = sbr.rel (%p520) target = $region68
      $region67: #{tpu_custom_call.1} parent=5 // pred_region
        // Predicated region
        $region69: #{tpu_custom_call.1} parent=67 // pred_check
          %p523 = pneg %p55
        $region70: #{tpu_custom_call.1} parent=67 // pred_check_branch
          %525 = sbr.rel (%p523) target = $region72
        $region71: #{tpu_custom_call.1} parent=67 // pred_region
          %s526 = sand.u32 %s45, 1
          %s527 = scalar_lea.sflag [#allocation7], %s526
          %s528 = sand.u32 %s45, 1
          %s529 = smul.addr %s528, 384
          %s530 = scalar_lea.vmem [#allocation6], %s529
          %s531 = smul.u32 6, %s35
          %s533 = ssub.s32 6144, 6144
          %534 = vsyncadd %s527, %s533
          %s535 = smul.addr %s531, 128
          %s536 = scalar_lea.hbm %s0, %s535
          %s537 = sshll.u32 %s530, 4
          %s538 = int_to_ptr.vmem [resolvable:$true] %s537
          %543 = dma.hbm_to_vmem [thread:$0]  %s536, 6144, %s538, %s527, 2304, 768, 48
        $region72: #{tpu_custom_call.1} parent=67 // pred_fallthru
          _
        // Predicated region
        $region73: #{tpu_custom_call.1} parent=67 // pred_check
          %p544 = pneg %p81
        $region74: #{tpu_custom_call.1} parent=67 // pred_check_branch
          %546 = sbr.rel (%p544) target = $region76
        $region75: #{tpu_custom_call.1} parent=67 // pred_region
          %s547 = sand.u32 %s35, 1
          %s548 = scalar_lea.sflag [#allocation10], %s547
          %s549 = sand.u32 %s71, 1
          %s550 = smul.addr %s549, 384
          %s551 = scalar_lea.vmem [#allocation9], %s550
          %s552 = smul.u32 6, %s35
          %s554 = ssub.s32 6144, 6144
          %555 = vsyncadd %s548, %s554
          %s556 = smul.addr %s552, 128
          %s557 = scalar_lea.hbm %s1, %s556
          %s558 = sshll.u32 %s551, 4
          %s559 = int_to_ptr.vmem [resolvable:$true] %s558
          %564 = dma.hbm_to_vmem [thread:$0]  %s557, 6144, %s559, %s548, 2304, 768, 48
        $region76: #{tpu_custom_call.1} parent=67 // pred_fallthru
          _
        // Predicated region
        $region77: #{tpu_custom_call.1} parent=67 // pred_check
          %p565 = pneg %p107
        $region78: #{tpu_custom_call.1} parent=67 // pred_check_branch
          %567 = sbr.rel (%p565) target = $region80
        $region79: #{tpu_custom_call.1} parent=67 // pred_region
          %s568 = sand.u32 %s35, 1
          %s569 = scalar_lea.sflag [#allocation10], %s568
          %s570 = sand.u32 %s97, 1
          %s571 = smul.addr %s570, 384
          %s572 = scalar_lea.vmem [#allocation11], %s571
          %s573 = smul.u32 6, %s35
          %s575 = ssub.s32 6144, 6144
          %576 = vsyncadd %s569, %s575
          %s577 = smul.addr %s573, 128
          %s578 = scalar_lea.hbm %s2, %s577
          %s579 = sshll.u32 %s572, 4
          %s580 = int_to_ptr.vmem [resolvable:$true] %s579
          %585 = dma.hbm_to_vmem [thread:$0]  %s578, 6144, %s580, %s569, 2304, 768, 48
        $region80: #{tpu_custom_call.1} parent=67 // pred_fallthru
          _
        // Predicated region
        $region81: #{tpu_custom_call.1} parent=67 // pred_check
          %p586 = pneg %p133
        $region82: #{tpu_custom_call.1} parent=67 // pred_check_branch
          %588 = sbr.rel (%p586) target = $region84
        $region83: #{tpu_custom_call.1} parent=67 // pred_region
          %s589 = sand.u32 %s35, 1
          %s590 = scalar_lea.sflag [#allocation13], %s589
          %s591 = sand.u32 %s123, 1
          %s592 = smul.addr %s591, 384
          %s593 = scalar_lea.vmem [#allocation12], %s592
          %s594 = smul.u32 6, %s35
          %s596 = ssub.s32 6144, 6144
          %597 = vsyncadd %s590, %s596
          %s598 = smul.addr %s594, 128
          %s599 = scalar_lea.hbm %s3, %s598
          %s600 = sshll.u32 %s593, 4
          %s601 = int_to_ptr.vmem [resolvable:$true] %s600
          %606 = dma.hbm_to_vmem [thread:$0]  %s599, 6144, %s601, %s590, 2304, 768, 48
        $region84: #{tpu_custom_call.1} parent=67 // pred_fallthru
          _
      $region68: #{tpu_custom_call.1} parent=5 // pred_fallthru
        _
      %p607 = scmp.le.s32.totalorder 1, %s35
      %p608 = scmp.lt.s32.totalorder %s35, 4
      %p609 = pnand %p607, %p608
      %p610 = pneg %p609
      // Predicated region
      $region85: #{tpu_custom_call.1} parent=5 // pred_check
        _
      $region86: #{tpu_custom_call.1} parent=5 // pred_check_branch
        %612 = sbr.rel (%p609) target = $region88
      $region87: #{tpu_custom_call.1} parent=5 // pred_region
        %s613 = ssub.s32 %s35, 1
        %s614 = sand.u32 %s48, 1
        %s615 = scalar_lea.sflag [#allocation7], %s614
        %s616 = sand.u32 %s48, 1
        %s617 = smul.addr %s616, 384
        %s618 = scalar_lea.vmem [#allocation6], %s617
        // Predicated region
        $region89: #{tpu_custom_call.1} parent=87 // pred_check
          %p619 = pneg %p61
        $region90: #{tpu_custom_call.1} parent=87 // pred_check_branch
          %621 = sbr.rel (%p619) target = $region92
        $region91: #{tpu_custom_call.1} parent=87 // pred_region
          %622 = dma.done %s615, 6144
        $region92: #{tpu_custom_call.1} parent=87 // pred_fallthru
          _
        %s623 = sand.u32 %s40, 1
        %s624 = scalar_lea.sflag [#allocation10], %s623
        %s625 = sand.u32 %s74, 1
        %s626 = smul.addr %s625, 384
        %s627 = scalar_lea.vmem [#allocation9], %s626
        // Predicated region
        $region93: #{tpu_custom_call.1} parent=87 // pred_check
          %p628 = pneg %p87
        $region94: #{tpu_custom_call.1} parent=87 // pred_check_branch
          %630 = sbr.rel (%p628) target = $region96
        $region95: #{tpu_custom_call.1} parent=87 // pred_region
          %631 = dma.done %s624, 6144
        $region96: #{tpu_custom_call.1} parent=87 // pred_fallthru
          _
        %s632 = sand.u32 %s40, 1
        %s633 = scalar_lea.sflag [#allocation10], %s632
        %s634 = sand.u32 %s100, 1
        %s635 = smul.addr %s634, 384
        %s636 = scalar_lea.vmem [#allocation11], %s635
        // Predicated region
        $region97: #{tpu_custom_call.1} parent=87 // pred_check
          %p637 = pneg %p113
        $region98: #{tpu_custom_call.1} parent=87 // pred_check_branch
          %639 = sbr.rel (%p637) target = $region100
        $region99: #{tpu_custom_call.1} parent=87 // pred_region
          %640 = dma.done %s633, 6144
        $region100: #{tpu_custom_call.1} parent=87 // pred_fallthru
          _
        %s641 = sand.u32 %s40, 1
        %s642 = scalar_lea.sflag [#allocation13], %s641
        %s643 = sand.u32 %s126, 1
        %s644 = smul.addr %s643, 384
        %s645 = scalar_lea.vmem [#allocation12], %s644
        // Predicated region
        $region101: #{tpu_custom_call.1} parent=87 // pred_check
          %p646 = pneg %p139
        $region102: #{tpu_custom_call.1} parent=87 // pred_check_branch
          %648 = sbr.rel (%p646) target = $region104
        $region103: #{tpu_custom_call.1} parent=87 // pred_region
          %649 = dma.done %s642, 6144
        $region104: #{tpu_custom_call.1} parent=87 // pred_fallthru
          _
        // Predicated region
        $region105: #{tpu_custom_call.1} parent=87 // pred_check
          %p650 = pneg %p223
        $region106: #{tpu_custom_call.1} parent=87 // pred_check_branch
          %652 = sbr.rel (%p650) target = $region108
        $region107: #{tpu_custom_call.1} parent=87 // pred_region
          %653 = dma.done [#allocation13], 16
        $region108: #{tpu_custom_call.1} parent=87 // pred_fallthru
          _
        // Predicated region
        $region109: #{tpu_custom_call.1} parent=87 // pred_check
          %p654 = pneg %p286
        $region110: #{tpu_custom_call.1} parent=87 // pred_check_branch
          %656 = sbr.rel (%p654) target = $region112
        $region111: #{tpu_custom_call.1} parent=87 // pred_region
          %657 = dma.done [#allocation16], 128
        $region112: #{tpu_custom_call.1} parent=87 // pred_fallthru
          _
        // Predicated region
        $region113: #{tpu_custom_call.1} parent=87 // pred_check
          %p658 = pneg %p307
        $region114: #{tpu_custom_call.1} parent=87 // pred_check_branch
          %660 = sbr.rel (%p658) target = $region116
        $region115: #{tpu_custom_call.1} parent=87 // pred_region
          %661 = dma.done [#allocation16], 128
        $region116: #{tpu_custom_call.1} parent=87 // pred_fallthru
          _
        // Predicated region
        $region117: #{tpu_custom_call.1} parent=87 // pred_check
          %p662 = pneg %p328
        $region118: #{tpu_custom_call.1} parent=87 // pred_check_branch
          %664 = sbr.rel (%p662) target = $region120
        $region119: #{tpu_custom_call.1} parent=87 // pred_region
          %665 = dma.done [#allocation19], 16
        $region120: #{tpu_custom_call.1} parent=87 // pred_fallthru
          _
        %s666 = sand.u32 %s48, 1
        %s667 = scalar_lea.sflag [#allocation7], %s666
        %s668 = sand.u32 %s48, 1
        %s669 = smul.addr %s668, 384
        %s670 = scalar_lea.vmem [#allocation6], %s669
        %p671 = pneg %p61
        %p672 = pneg %p58
        %s673 = sand.u32 %s40, 1
        %s674 = scalar_lea.sflag [#allocation10], %s673
        %s675 = sand.u32 %s74, 1
        %s676 = smul.addr %s675, 384
        %s677 = scalar_lea.vmem [#allocation9], %s676
        %p678 = pneg %p87
        %p679 = pneg %p84
        %s680 = sand.u32 %s40, 1
        %s681 = scalar_lea.sflag [#allocation10], %s680
        %s682 = sand.u32 %s100, 1
        %s683 = smul.addr %s682, 384
        %s684 = scalar_lea.vmem [#allocation11], %s683
        %p685 = pneg %p113
        %p686 = pneg %p110
        %s687 = sand.u32 %s40, 1
        %s688 = scalar_lea.sflag [#allocation13], %s687
        %s689 = sand.u32 %s126, 1
        %s690 = smul.addr %s689, 384
        %s691 = scalar_lea.vmem [#allocation12], %s690
        %p692 = pneg %p139
        %p693 = pneg %p136
        %p694 = pneg %p160
        %p695 = pneg %p157
        %p696 = pneg %p181
        %p697 = pneg %p178
        %p698 = pneg %p202
        %p699 = pneg %p199
        %p700 = pneg %p223
        %p701 = pneg %p220
        %p702 = pneg %p244
        %p703 = pneg %p241
        %p704 = pneg %p265
        %p705 = pneg %p262
        %p706 = pneg %p286
        %p707 = pneg %p283
        %p708 = pneg %p307
        %p709 = pneg %p304
        %p710 = pneg %p328
        %p711 = pneg %p325
        %p712 = pneg %p349
        %p713 = pneg %p346
        %p714 = pneg %p370
        %p715 = pneg %p367
        %p716 = pneg %p391
        %p717 = pneg %p388
        %p718 = pneg %p412
        %p719 = pneg %p409
        %p720 = pneg %p433
        %p721 = pneg %p430
        %s722 = smul.u32 6, %s40
        %s723 = smul.u32 6, %s40
        %s724 = smul.u32 6, %s40
        %s725 = smul.u32 6, %s40
        %p726 = scmp.eq.s32.totalorder %s40, 0
        // Predicated region
        $region121: #{tpu_custom_call.1} parent=87 // pred_check
          %p727 = pneg %p726
        $region122: #{tpu_custom_call.1} parent=87 // pred_check_branch
          %729 = sbr.rel (%p727) target = $region124
        $region123: #{tpu_custom_call.1} parent=87 // pred_region
          %vm730 = vcmask 64512
          %731 = vst.msk [vmem:[#allocation2] sm:$0xff] %vm730, 0.0
          %732 = vst.msk [vmem:[#allocation3] sm:$0xff] %vm730, 0.0
          %733 = vst.msk [vmem:[#allocation4] sm:$0xff] %vm730, 0.0
          %734 = vst.msk [vmem:[#allocation5] sm:$0xff] %vm730, 0.0
        $region124: #{tpu_custom_call.1} parent=87 // pred_fallthru
          _
        %v735 = vld [vmem:[#allocation2] sm:$0xff]
        %v736 = vld [vmem:[%s618] sm:$0xff]
        %v737 = vld [vmem:[%s618 + $0x8] sm:$0xff]
        %v738 = vld [vmem:[%s618 + $0x10] sm:$0xff]
        %v739 = vld [vmem:[%s618 + $0x18] sm:$0xff]
        %v740 = vld [vmem:[%s618 + $0x20] sm:$0xff]
        %v741 = vld [vmem:[%s618 + $0x28] sm:$0xff]
        %v742 = vld [vmem:[%s618 + $0x30] sm:$0xff]
        %v743 = vld [vmem:[%s618 + $0x38] sm:$0xff]
        %v744 = vld [vmem:[%s618 + $0x40] sm:$0xff]
        %v745 = vld [vmem:[%s618 + $0x48] sm:$0xff]
        %v746 = vld [vmem:[%s618 + $0x50] sm:$0xff]
        %v747 = vld [vmem:[%s618 + $0x58] sm:$0xff]
        %v748 = vld [vmem:[%s618 + $0x60] sm:$0xff]
        %v749 = vld [vmem:[%s618 + $0x68] sm:$0xff]
        %v750 = vld [vmem:[%s618 + $0x70] sm:$0xff]
        %v751 = vld [vmem:[%s618 + $0x78] sm:$0xff]
        %v752 = vld [vmem:[%s618 + $0x80] sm:$0xff]
        %v753 = vld [vmem:[%s618 + $0x88] sm:$0xff]
        %v754 = vld [vmem:[%s618 + $0x90] sm:$0xff]
        %v755 = vld [vmem:[%s618 + $0x98] sm:$0xff]
        %v756 = vld [vmem:[%s618 + $0xa0] sm:$0xff]
        %v757 = vld [vmem:[%s618 + $0xa8] sm:$0xff]
        %v758 = vld [vmem:[%s618 + $0xb0] sm:$0xff]
        %v759 = vld [vmem:[%s618 + $0xb8] sm:$0xff]
        %v760 = vld [vmem:[%s618 + $0xc0] sm:$0xff]
        %v761 = vld [vmem:[%s618 + $0xc8] sm:$0xff]
        %v762 = vld [vmem:[%s618 + $0xd0] sm:$0xff]
        %v763 = vld [vmem:[%s618 + $0xd8] sm:$0xff]
        %v764 = vld [vmem:[%s618 + $0xe0] sm:$0xff]
        %v765 = vld [vmem:[%s618 + $0xe8] sm:$0xff]
        %v766 = vld [vmem:[%s618 + $0xf0] sm:$0xff]
        %v767 = vld [vmem:[%s618 + $0xf8] sm:$0xff]
        %v768 = vld [vmem:[%s618 + $0x100] sm:$0xff]
        %v769 = vld [vmem:[%s618 + $0x108] sm:$0xff]
        %v770 = vld [vmem:[%s618 + $0x110] sm:$0xff]
        %v771 = vld [vmem:[%s618 + $0x118] sm:$0xff]
        %v772 = vld [vmem:[%s618 + $0x120] sm:$0xff]
        %v773 = vld [vmem:[%s618 + $0x128] sm:$0xff]
        %v774 = vld [vmem:[%s618 + $0x130] sm:$0xff]
        %v775 = vld [vmem:[%s618 + $0x138] sm:$0xff]
        %v776 = vld [vmem:[%s618 + $0x140] sm:$0xff]
        %v777 = vld [vmem:[%s618 + $0x148] sm:$0xff]
        %v778 = vld [vmem:[%s618 + $0x150] sm:$0xff]
        %v779 = vld [vmem:[%s618 + $0x158] sm:$0xff]
        %v780 = vld [vmem:[%s618 + $0x160] sm:$0xff]
        %v781 = vld [vmem:[%s618 + $0x168] sm:$0xff]
        %v782 = vld [vmem:[%s618 + $0x170] sm:$0xff]
        %v783 = vld [vmem:[%s618 + $0x178] sm:$0xff]
        %v784 = vadd.f32 %v736, %v737
        %v785 = vadd.f32 %v784, %v738
        %v786 = vadd.f32 %v785, %v739
        %v787 = vadd.f32 %v786, %v740
        %v788 = vadd.f32 %v787, %v741
        %789 = vadd.xlane.f32.xlu0 %v788
        %v790 = vpop.xlane.xlu0 %789
        %v791 = vadd.f32 %v742, %v743
        %v792 = vadd.f32 %v791, %v744
        %v793 = vadd.f32 %v792, %v745
        %v794 = vadd.f32 %v793, %v746
        %v795 = vadd.f32 %v794, %v747
        %796 = vadd.xlane.f32.xlu0 %v795
        %v797 = vpop.xlane.xlu0 %796
        %v798 = vadd.f32 %v748, %v749
        %v799 = vadd.f32 %v798, %v750
        %v800 = vadd.f32 %v799, %v751
        %v801 = vadd.f32 %v800, %v752
        %v802 = vadd.f32 %v801, %v753
        %803 = vadd.xlane.f32.xlu0 %v802
        %v804 = vpop.xlane.xlu0 %803
        %v805 = vadd.f32 %v754, %v755
        %v806 = vadd.f32 %v805, %v756
        %v807 = vadd.f32 %v806, %v757
        %v808 = vadd.f32 %v807, %v758
        %v809 = vadd.f32 %v808, %v759
        %810 = vadd.xlane.f32.xlu0 %v809
        %v811 = vpop.xlane.xlu0 %810
        %v812 = vadd.f32 %v760, %v761
        %v813 = vadd.f32 %v812, %v762
        %v814 = vadd.f32 %v813, %v763
        %v815 = vadd.f32 %v814, %v764
        %v816 = vadd.f32 %v815, %v765
        %817 = vadd.xlane.f32.xlu0 %v816
        %v818 = vpop.xlane.xlu0 %817
        %v819 = vadd.f32 %v766, %v767
        %v820 = vadd.f32 %v819, %v768
        %v821 = vadd.f32 %v820, %v769
        %v822 = vadd.f32 %v821, %v770
        %v823 = vadd.f32 %v822, %v771
        %824 = vadd.xlane.f32.xlu0 %v823
        %v825 = vpop.xlane.xlu0 %824
        %v826 = vadd.f32 %v772, %v773
        %v827 = vadd.f32 %v826, %v774
        %v828 = vadd.f32 %v827, %v775
        %v829 = vadd.f32 %v828, %v776
        %v830 = vadd.f32 %v829, %v777
        %831 = vadd.xlane.f32.xlu0 %v830
        %v832 = vpop.xlane.xlu0 %831
        %v833 = vadd.f32 %v778, %v779
        %v834 = vadd.f32 %v833, %v780
        %v835 = vadd.f32 %v834, %v781
        %v836 = vadd.f32 %v835, %v782
        %v837 = vadd.f32 %v836, %v783
        %838 = vadd.xlane.f32.xlu0 %v837
        %v839 = vpop.xlane.xlu0 %838
        %v848 = vlaneseq
        %v849 = vand.u32 %v848, 127
        %v850 = vlaneseq
        %v851 = vshrl.u32 %v850, 7
        %v852 = vsub.s32 %v849, %v851
        %v853 = vrot.slane %v790, %v852
        %v854 = vlaneseq
        %v855 = vshrl.u32 %v854, 7
        %v856 = vsub.s32 %v849, %v855
        %v857 = vrot.slane %v797, %v856
        %v858 = vlaneseq
        %v859 = vshrl.u32 %v858, 7
        %v860 = vsub.s32 %v849, %v859
        %v861 = vrot.slane %v804, %v860
        %v862 = vlaneseq
        %v863 = vshrl.u32 %v862, 7
        %v864 = vsub.s32 %v849, %v863
        %v865 = vrot.slane %v811, %v864
        %v866 = vlaneseq
        %v867 = vshrl.u32 %v866, 7
        %v868 = vsub.s32 %v849, %v867
        %v869 = vrot.slane %v818, %v868
        %v870 = vlaneseq
        %v871 = vshrl.u32 %v870, 7
        %v872 = vsub.s32 %v849, %v871
        %v873 = vrot.slane %v825, %v872
        %v874 = vlaneseq
        %v875 = vshrl.u32 %v874, 7
        %v876 = vsub.s32 %v849, %v875
        %v877 = vrot.slane %v832, %v876
        %v878 = vlaneseq
        %v879 = vshrl.u32 %v878, 7
        %v880 = vsub.s32 %v849, %v879
        %v881 = vrot.slane %v839, %v880
        %vm882 = vcmask 1041409
        %v883 = vsel %vm882, %v857, %v853
        %vm884 = vcmask 1042434
        %v885 = vsel %vm884, %v861, %v883
        %vm886 = vcmask 1043459
        %v887 = vsel %vm886, %v865, %v885
        %vm888 = vcmask 1044484
        %v889 = vsel %vm888, %v869, %v887
        %vm890 = vcmask 1045509
        %v891 = vsel %vm890, %v873, %v889
        %vm892 = vcmask 1046534
        %v893 = vsel %vm892, %v877, %v891
        %vm894 = vcmask 1047559
        %v895 = vsel %vm894, %v881, %v893
        %v897 = vadd.f32 %v735, %v895
        %vm898 = vcmask 64512
        %899 = vst.msk [vmem:[#allocation2] sm:$0xff] %vm898, %v897
        %v900 = vld [vmem:[#allocation3] sm:$0xff]
        %v901 = vld [vmem:[%s627] sm:$0xff]
        %v902 = vld [vmem:[%s627 + $0x8] sm:$0xff]
        %v903 = vld [vmem:[%s627 + $0x10] sm:$0xff]
        %v904 = vld [vmem:[%s627 + $0x18] sm:$0xff]
        %v905 = vld [vmem:[%s627 + $0x20] sm:$0xff]
        %v906 = vld [vmem:[%s627 + $0x28] sm:$0xff]
        %v907 = vld [vmem:[%s627 + $0x30] sm:$0xff]
        %v908 = vld [vmem:[%s627 + $0x38] sm:$0xff]
        %v909 = vld [vmem:[%s627 + $0x40] sm:$0xff]
        %v910 = vld [vmem:[%s627 + $0x48] sm:$0xff]
        %v911 = vld [vmem:[%s627 + $0x50] sm:$0xff]
        %v912 = vld [vmem:[%s627 + $0x58] sm:$0xff]
        %v913 = vld [vmem:[%s627 + $0x60] sm:$0xff]
        %v914 = vld [vmem:[%s627 + $0x68] sm:$0xff]
        %v915 = vld [vmem:[%s627 + $0x70] sm:$0xff]
        %v916 = vld [vmem:[%s627 + $0x78] sm:$0xff]
        %v917 = vld [vmem:[%s627 + $0x80] sm:$0xff]
        %v918 = vld [vmem:[%s627 + $0x88] sm:$0xff]
        %v919 = vld [vmem:[%s627 + $0x90] sm:$0xff]
        %v920 = vld [vmem:[%s627 + $0x98] sm:$0xff]
        %v921 = vld [vmem:[%s627 + $0xa0] sm:$0xff]
        %v922 = vld [vmem:[%s627 + $0xa8] sm:$0xff]
        %v923 = vld [vmem:[%s627 + $0xb0] sm:$0xff]
        %v924 = vld [vmem:[%s627 + $0xb8] sm:$0xff]
        %v925 = vld [vmem:[%s627 + $0xc0] sm:$0xff]
        %v926 = vld [vmem:[%s627 + $0xc8] sm:$0xff]
        %v927 = vld [vmem:[%s627 + $0xd0] sm:$0xff]
        %v928 = vld [vmem:[%s627 + $0xd8] sm:$0xff]
        %v929 = vld [vmem:[%s627 + $0xe0] sm:$0xff]
        %v930 = vld [vmem:[%s627 + $0xe8] sm:$0xff]
        %v931 = vld [vmem:[%s627 + $0xf0] sm:$0xff]
        %v932 = vld [vmem:[%s627 + $0xf8] sm:$0xff]
        %v933 = vld [vmem:[%s627 + $0x100] sm:$0xff]
        %v934 = vld [vmem:[%s627 + $0x108] sm:$0xff]
        %v935 = vld [vmem:[%s627 + $0x110] sm:$0xff]
        %v936 = vld [vmem:[%s627 + $0x118] sm:$0xff]
        %v937 = vld [vmem:[%s627 + $0x120] sm:$0xff]
        %v938 = vld [vmem:[%s627 + $0x128] sm:$0xff]
        %v939 = vld [vmem:[%s627 + $0x130] sm:$0xff]
        %v940 = vld [vmem:[%s627 + $0x138] sm:$0xff]
        %v941 = vld [vmem:[%s627 + $0x140] sm:$0xff]
        %v942 = vld [vmem:[%s627 + $0x148] sm:$0xff]
        %v943 = vld [vmem:[%s627 + $0x150] sm:$0xff]
        %v944 = vld [vmem:[%s627 + $0x158] sm:$0xff]
        %v945 = vld [vmem:[%s627 + $0x160] sm:$0xff]
        %v946 = vld [vmem:[%s627 + $0x168] sm:$0xff]
        %v947 = vld [vmem:[%s627 + $0x170] sm:$0xff]
        %v948 = vld [vmem:[%s627 + $0x178] sm:$0xff]
        %v949 = vadd.f32 %v901, %v902
        %v950 = vadd.f32 %v949, %v903
        %v951 = vadd.f32 %v950, %v904
        %v952 = vadd.f32 %v951, %v905
        %v953 = vadd.f32 %v952, %v906
        %954 = vadd.xlane.f32.xlu0 %v953
        %v955 = vpop.xlane.xlu0 %954
        %v956 = vadd.f32 %v907, %v908
        %v957 = vadd.f32 %v956, %v909
        %v958 = vadd.f32 %v957, %v910
        %v959 = vadd.f32 %v958, %v911
        %v960 = vadd.f32 %v959, %v912
        %961 = vadd.xlane.f32.xlu0 %v960
        %v962 = vpop.xlane.xlu0 %961
        %v963 = vadd.f32 %v913, %v914
        %v964 = vadd.f32 %v963, %v915
        %v965 = vadd.f32 %v964, %v916
        %v966 = vadd.f32 %v965, %v917
        %v967 = vadd.f32 %v966, %v918
        %968 = vadd.xlane.f32.xlu0 %v967
        %v969 = vpop.xlane.xlu0 %968
        %v970 = vadd.f32 %v919, %v920
        %v971 = vadd.f32 %v970, %v921
        %v972 = vadd.f32 %v971, %v922
        %v973 = vadd.f32 %v972, %v923
        %v974 = vadd.f32 %v973, %v924
        %975 = vadd.xlane.f32.xlu0 %v974
        %v976 = vpop.xlane.xlu0 %975
        %v977 = vadd.f32 %v925, %v926
        %v978 = vadd.f32 %v977, %v927
        %v979 = vadd.f32 %v978, %v928
        %v980 = vadd.f32 %v979, %v929
        %v981 = vadd.f32 %v980, %v930
        %982 = vadd.xlane.f32.xlu0 %v981
        %v983 = vpop.xlane.xlu0 %982
        %v984 = vadd.f32 %v931, %v932
        %v985 = vadd.f32 %v984, %v933
        %v986 = vadd.f32 %v985, %v934
        %v987 = vadd.f32 %v986, %v935
        %v988 = vadd.f32 %v987, %v936
        %989 = vadd.xlane.f32.xlu0 %v988
        %v990 = vpop.xlane.xlu0 %989
        %v991 = vadd.f32 %v937, %v938
        %v992 = vadd.f32 %v991, %v939
        %v993 = vadd.f32 %v992, %v940
        %v994 = vadd.f32 %v993, %v941
        %v995 = vadd.f32 %v994, %v942
        %996 = vadd.xlane.f32.xlu0 %v995
        %v997 = vpop.xlane.xlu0 %996
        %v998 = vadd.f32 %v943, %v944
        %v999 = vadd.f32 %v998, %v945
        %v1000 = vadd.f32 %v999, %v946
        %v1001 = vadd.f32 %v1000, %v947
        %v1002 = vadd.f32 %v1001, %v948
        %1003 = vadd.xlane.f32.xlu0 %v1002
        %v1004 = vpop.xlane.xlu0 %1003
        %v1013 = vlaneseq
        %v1014 = vshrl.u32 %v1013, 7
        %v1015 = vsub.s32 %v849, %v1014
        %v1016 = vrot.slane %v955, %v1015
        %v1017 = vlaneseq
        %v1018 = vshrl.u32 %v1017, 7
        %v1019 = vsub.s32 %v849, %v1018
        %v1020 = vrot.slane %v962, %v1019
        %v1021 = vlaneseq
        %v1022 = vshrl.u32 %v1021, 7
        %v1023 = vsub.s32 %v849, %v1022
        %v1024 = vrot.slane %v969, %v1023
        %v1025 = vlaneseq
        %v1026 = vshrl.u32 %v1025, 7
        %v1027 = vsub.s32 %v849, %v1026
        %v1028 = vrot.slane %v976, %v1027
        %v1029 = vlaneseq
        %v1030 = vshrl.u32 %v1029, 7
        %v1031 = vsub.s32 %v849, %v1030
        %v1032 = vrot.slane %v983, %v1031
        %v1033 = vlaneseq
        %v1034 = vshrl.u32 %v1033, 7
        %v1035 = vsub.s32 %v849, %v1034
        %v1036 = vrot.slane %v990, %v1035
        %v1037 = vlaneseq
        %v1038 = vshrl.u32 %v1037, 7
        %v1039 = vsub.s32 %v849, %v1038
        %v1040 = vrot.slane %v997, %v1039
        %v1041 = vlaneseq
        %v1042 = vshrl.u32 %v1041, 7
        %v1043 = vsub.s32 %v849, %v1042
        %v1044 = vrot.slane %v1004, %v1043
        %v1045 = vsel %vm882, %v1020, %v1016
        %v1046 = vsel %vm884, %v1024, %v1045
        %v1047 = vsel %vm886, %v1028, %v1046
        %v1048 = vsel %vm888, %v1032, %v1047
        %v1049 = vsel %vm890, %v1036, %v1048
        %v1050 = vsel %vm892, %v1040, %v1049
        %v1051 = vsel %vm894, %v1044, %v1050
        %v1053 = vadd.f32 %v900, %v1051
        %1054 = vst.msk [vmem:[#allocation3] sm:$0xff] %vm898, %v1053
        %v1055 = vld [vmem:[#allocation4] sm:$0xff]
        %v1056 = vld [vmem:[%s636] sm:$0xff]
        %v1057 = vld [vmem:[%s636 + $0x8] sm:$0xff]
        %v1058 = vld [vmem:[%s636 + $0x10] sm:$0xff]
        %v1059 = vld [vmem:[%s636 + $0x18] sm:$0xff]
        %v1060 = vld [vmem:[%s636 + $0x20] sm:$0xff]
        %v1061 = vld [vmem:[%s636 + $0x28] sm:$0xff]
        %v1062 = vld [vmem:[%s636 + $0x30] sm:$0xff]
        %v1063 = vld [vmem:[%s636 + $0x38] sm:$0xff]
        %v1064 = vld [vmem:[%s636 + $0x40] sm:$0xff]
        %v1065 = vld [vmem:[%s636 + $0x48] sm:$0xff]
        %v1066 = vld [vmem:[%s636 + $0x50] sm:$0xff]
        %v1067 = vld [vmem:[%s636 + $0x58] sm:$0xff]
        %v1068 = vld [vmem:[%s636 + $0x60] sm:$0xff]
        %v1069 = vld [vmem:[%s636 + $0x68] sm:$0xff]
        %v1070 = vld [vmem:[%s636 + $0x70] sm:$0xff]
        %v1071 = vld [vmem:[%s636 + $0x78] sm:$0xff]
        %v1072 = vld [vmem:[%s636 + $0x80] sm:$0xff]
        %v1073 = vld [vmem:[%s636 + $0x88] sm:$0xff]
        %v1074 = vld [vmem:[%s636 + $0x90] sm:$0xff]
        %v1075 = vld [vmem:[%s636 + $0x98] sm:$0xff]
        %v1076 = vld [vmem:[%s636 + $0xa0] sm:$0xff]
        %v1077 = vld [vmem:[%s636 + $0xa8] sm:$0xff]
        %v1078 = vld [vmem:[%s636 + $0xb0] sm:$0xff]
        %v1079 = vld [vmem:[%s636 + $0xb8] sm:$0xff]
        %v1080 = vld [vmem:[%s636 + $0xc0] sm:$0xff]
        %v1081 = vld [vmem:[%s636 + $0xc8] sm:$0xff]
        %v1082 = vld [vmem:[%s636 + $0xd0] sm:$0xff]
        %v1083 = vld [vmem:[%s636 + $0xd8] sm:$0xff]
        %v1084 = vld [vmem:[%s636 + $0xe0] sm:$0xff]
        %v1085 = vld [vmem:[%s636 + $0xe8] sm:$0xff]
        %v1086 = vld [vmem:[%s636 + $0xf0] sm:$0xff]
        %v1087 = vld [vmem:[%s636 + $0xf8] sm:$0xff]
        %v1088 = vld [vmem:[%s636 + $0x100] sm:$0xff]
        %v1089 = vld [vmem:[%s636 + $0x108] sm:$0xff]
        %v1090 = vld [vmem:[%s636 + $0x110] sm:$0xff]
        %v1091 = vld [vmem:[%s636 + $0x118] sm:$0xff]
        %v1092 = vld [vmem:[%s636 + $0x120] sm:$0xff]
        %v1093 = vld [vmem:[%s636 + $0x128] sm:$0xff]
        %v1094 = vld [vmem:[%s636 + $0x130] sm:$0xff]
        %v1095 = vld [vmem:[%s636 + $0x138] sm:$0xff]
        %v1096 = vld [vmem:[%s636 + $0x140] sm:$0xff]
        %v1097 = vld [vmem:[%s636 + $0x148] sm:$0xff]
        %v1098 = vld [vmem:[%s636 + $0x150] sm:$0xff]
        %v1099 = vld [vmem:[%s636 + $0x158] sm:$0xff]
        %v1100 = vld [vmem:[%s636 + $0x160] sm:$0xff]
        %v1101 = vld [vmem:[%s636 + $0x168] sm:$0xff]
        %v1102 = vld [vmem:[%s636 + $0x170] sm:$0xff]
        %v1103 = vld [vmem:[%s636 + $0x178] sm:$0xff]
        %v1104 = vadd.f32 %v1056, %v1057
        %v1105 = vadd.f32 %v1104, %v1058
        %v1106 = vadd.f32 %v1105, %v1059
        %v1107 = vadd.f32 %v1106, %v1060
        %v1108 = vadd.f32 %v1107, %v1061
        %1109 = vadd.xlane.f32.xlu0 %v1108
        %v1110 = vpop.xlane.xlu0 %1109
        %v1111 = vadd.f32 %v1062, %v1063
        %v1112 = vadd.f32 %v1111, %v1064
        %v1113 = vadd.f32 %v1112, %v1065
        %v1114 = vadd.f32 %v1113, %v1066
        %v1115 = vadd.f32 %v1114, %v1067
        %1116 = vadd.xlane.f32.xlu0 %v1115
        %v1117 = vpop.xlane.xlu0 %1116
        %v1118 = vadd.f32 %v1068, %v1069
        %v1119 = vadd.f32 %v1118, %v1070
        %v1120 = vadd.f32 %v1119, %v1071
        %v1121 = vadd.f32 %v1120, %v1072
        %v1122 = vadd.f32 %v1121, %v1073
        %1123 = vadd.xlane.f32.xlu0 %v1122
        %v1124 = vpop.xlane.xlu0 %1123
        %v1125 = vadd.f32 %v1074, %v1075
        %v1126 = vadd.f32 %v1125, %v1076
        %v1127 = vadd.f32 %v1126, %v1077
        %v1128 = vadd.f32 %v1127, %v1078
        %v1129 = vadd.f32 %v1128, %v1079
        %1130 = vadd.xlane.f32.xlu0 %v1129
        %v1131 = vpop.xlane.xlu0 %1130
        %v1132 = vadd.f32 %v1080, %v1081
        %v1133 = vadd.f32 %v1132, %v1082
        %v1134 = vadd.f32 %v1133, %v1083
        %v1135 = vadd.f32 %v1134, %v1084
        %v1136 = vadd.f32 %v1135, %v1085
        %1137 = vadd.xlane.f32.xlu0 %v1136
        %v1138 = vpop.xlane.xlu0 %1137
        %v1139 = vadd.f32 %v1086, %v1087
        %v1140 = vadd.f32 %v1139, %v1088
        %v1141 = vadd.f32 %v1140, %v1089
        %v1142 = vadd.f32 %v1141, %v1090
        %v1143 = vadd.f32 %v1142, %v1091
        %1144 = vadd.xlane.f32.xlu0 %v1143
        %v1145 = vpop.xlane.xlu0 %1144
        %v1146 = vadd.f32 %v1092, %v1093
        %v1147 = vadd.f32 %v1146, %v1094
        %v1148 = vadd.f32 %v1147, %v1095
        %v1149 = vadd.f32 %v1148, %v1096
        %v1150 = vadd.f32 %v1149, %v1097
        %1151 = vadd.xlane.f32.xlu0 %v1150
        %v1152 = vpop.xlane.xlu0 %1151
        %v1153 = vadd.f32 %v1098, %v1099
        %v1154 = vadd.f32 %v1153, %v1100
        %v1155 = vadd.f32 %v1154, %v1101
        %v1156 = vadd.f32 %v1155, %v1102
        %v1157 = vadd.f32 %v1156, %v1103
        %1158 = vadd.xlane.f32.xlu0 %v1157
        %v1159 = vpop.xlane.xlu0 %1158
        %v1168 = vlaneseq
        %v1169 = vshrl.u32 %v1168, 7
        %v1170 = vsub.s32 %v849, %v1169
        %v1171 = vrot.slane %v1110, %v1170
        %v1172 = vlaneseq
        %v1173 = vshrl.u32 %v1172, 7
        %v1174 = vsub.s32 %v849, %v1173
        %v1175 = vrot.slane %v1117, %v1174
        %v1176 = vlaneseq
        %v1177 = vshrl.u32 %v1176, 7
        %v1178 = vsub.s32 %v849, %v1177
        %v1179 = vrot.slane %v1124, %v1178
        %v1180 = vlaneseq
        %v1181 = vshrl.u32 %v1180, 7
        %v1182 = vsub.s32 %v849, %v1181
        %v1183 = vrot.slane %v1131, %v1182
        %v1184 = vlaneseq
        %v1185 = vshrl.u32 %v1184, 7
        %v1186 = vsub.s32 %v849, %v1185
        %v1187 = vrot.slane %v1138, %v1186
        %v1188 = vlaneseq
        %v1189 = vshrl.u32 %v1188, 7
        %v1190 = vsub.s32 %v849, %v1189
        %v1191 = vrot.slane %v1145, %v1190
        %v1192 = vlaneseq
        %v1193 = vshrl.u32 %v1192, 7
        %v1194 = vsub.s32 %v849, %v1193
        %v1195 = vrot.slane %v1152, %v1194
        %v1196 = vlaneseq
        %v1197 = vshrl.u32 %v1196, 7
        %v1198 = vsub.s32 %v849, %v1197
        %v1199 = vrot.slane %v1159, %v1198
        %v1200 = vsel %vm882, %v1175, %v1171
        %v1201 = vsel %vm884, %v1179, %v1200
        %v1202 = vsel %vm886, %v1183, %v1201
        %v1203 = vsel %vm888, %v1187, %v1202
        %v1204 = vsel %vm890, %v1191, %v1203
        %v1205 = vsel %vm892, %v1195, %v1204
        %v1206 = vsel %vm894, %v1199, %v1205
        %v1208 = vadd.f32 %v1055, %v1206
        %1209 = vst.msk [vmem:[#allocation4] sm:$0xff] %vm898, %v1208
        %v1210 = vld [vmem:[#allocation5] sm:$0xff]
        %v1211 = vld [vmem:[%s645] sm:$0xff]
        %v1212 = vld [vmem:[%s645 + $0x8] sm:$0xff]
        %v1213 = vld [vmem:[%s645 + $0x10] sm:$0xff]
        %v1214 = vld [vmem:[%s645 + $0x18] sm:$0xff]
        %v1215 = vld [vmem:[%s645 + $0x20] sm:$0xff]
        %v1216 = vld [vmem:[%s645 + $0x28] sm:$0xff]
        %v1217 = vld [vmem:[%s645 + $0x30] sm:$0xff]
        %v1218 = vld [vmem:[%s645 + $0x38] sm:$0xff]
        %v1219 = vld [vmem:[%s645 + $0x40] sm:$0xff]
        %v1220 = vld [vmem:[%s645 + $0x48] sm:$0xff]
        %v1221 = vld [vmem:[%s645 + $0x50] sm:$0xff]
        %v1222 = vld [vmem:[%s645 + $0x58] sm:$0xff]
        %v1223 = vld [vmem:[%s645 + $0x60] sm:$0xff]
        %v1224 = vld [vmem:[%s645 + $0x68] sm:$0xff]
        %v1225 = vld [vmem:[%s645 + $0x70] sm:$0xff]
        %v1226 = vld [vmem:[%s645 + $0x78] sm:$0xff]
        %v1227 = vld [vmem:[%s645 + $0x80] sm:$0xff]
        %v1228 = vld [vmem:[%s645 + $0x88] sm:$0xff]
        %v1229 = vld [vmem:[%s645 + $0x90] sm:$0xff]
        %v1230 = vld [vmem:[%s645 + $0x98] sm:$0xff]
        %v1231 = vld [vmem:[%s645 + $0xa0] sm:$0xff]
        %v1232 = vld [vmem:[%s645 + $0xa8] sm:$0xff]
        %v1233 = vld [vmem:[%s645 + $0xb0] sm:$0xff]
        %v1234 = vld [vmem:[%s645 + $0xb8] sm:$0xff]
        %v1235 = vld [vmem:[%s645 + $0xc0] sm:$0xff]
        %v1236 = vld [vmem:[%s645 + $0xc8] sm:$0xff]
        %v1237 = vld [vmem:[%s645 + $0xd0] sm:$0xff]
        %v1238 = vld [vmem:[%s645 + $0xd8] sm:$0xff]
        %v1239 = vld [vmem:[%s645 + $0xe0] sm:$0xff]
        %v1240 = vld [vmem:[%s645 + $0xe8] sm:$0xff]
        %v1241 = vld [vmem:[%s645 + $0xf0] sm:$0xff]
        %v1242 = vld [vmem:[%s645 + $0xf8] sm:$0xff]
        %v1243 = vld [vmem:[%s645 + $0x100] sm:$0xff]
        %v1244 = vld [vmem:[%s645 + $0x108] sm:$0xff]
        %v1245 = vld [vmem:[%s645 + $0x110] sm:$0xff]
        %v1246 = vld [vmem:[%s645 + $0x118] sm:$0xff]
        %v1247 = vld [vmem:[%s645 + $0x120] sm:$0xff]
        %v1248 = vld [vmem:[%s645 + $0x128] sm:$0xff]
        %v1249 = vld [vmem:[%s645 + $0x130] sm:$0xff]
        %v1250 = vld [vmem:[%s645 + $0x138] sm:$0xff]
        %v1251 = vld [vmem:[%s645 + $0x140] sm:$0xff]
        %v1252 = vld [vmem:[%s645 + $0x148] sm:$0xff]
        %v1253 = vld [vmem:[%s645 + $0x150] sm:$0xff]
        %v1254 = vld [vmem:[%s645 + $0x158] sm:$0xff]
        %v1255 = vld [vmem:[%s645 + $0x160] sm:$0xff]
        %v1256 = vld [vmem:[%s645 + $0x168] sm:$0xff]
        %v1257 = vld [vmem:[%s645 + $0x170] sm:$0xff]
        %v1258 = vld [vmem:[%s645 + $0x178] sm:$0xff]
        %v1259 = vadd.f32 %v1211, %v1212
        %v1260 = vadd.f32 %v1259, %v1213
        %v1261 = vadd.f32 %v1260, %v1214
        %v1262 = vadd.f32 %v1261, %v1215
        %v1263 = vadd.f32 %v1262, %v1216
        %1264 = vadd.xlane.f32.xlu0 %v1263
        %v1265 = vpop.xlane.xlu0 %1264
        %v1266 = vadd.f32 %v1217, %v1218
        %v1267 = vadd.f32 %v1266, %v1219
        %v1268 = vadd.f32 %v1267, %v1220
        %v1269 = vadd.f32 %v1268, %v1221
        %v1270 = vadd.f32 %v1269, %v1222
        %1271 = vadd.xlane.f32.xlu0 %v1270
        %v1272 = vpop.xlane.xlu0 %1271
        %v1273 = vadd.f32 %v1223, %v1224
        %v1274 = vadd.f32 %v1273, %v1225
        %v1275 = vadd.f32 %v1274, %v1226
        %v1276 = vadd.f32 %v1275, %v1227
        %v1277 = vadd.f32 %v1276, %v1228
        %1278 = vadd.xlane.f32.xlu0 %v1277
        %v1279 = vpop.xlane.xlu0 %1278
        %v1280 = vadd.f32 %v1229, %v1230
        %v1281 = vadd.f32 %v1280, %v1231
        %v1282 = vadd.f32 %v1281, %v1232
        %v1283 = vadd.f32 %v1282, %v1233
        %v1284 = vadd.f32 %v1283, %v1234
        %1285 = vadd.xlane.f32.xlu0 %v1284
        %v1286 = vpop.xlane.xlu0 %1285
        %v1287 = vadd.f32 %v1235, %v1236
        %v1288 = vadd.f32 %v1287, %v1237
        %v1289 = vadd.f32 %v1288, %v1238
        %v1290 = vadd.f32 %v1289, %v1239
        %v1291 = vadd.f32 %v1290, %v1240
        %1292 = vadd.xlane.f32.xlu0 %v1291
        %v1293 = vpop.xlane.xlu0 %1292
        %v1294 = vadd.f32 %v1241, %v1242
        %v1295 = vadd.f32 %v1294, %v1243
        %v1296 = vadd.f32 %v1295, %v1244
        %v1297 = vadd.f32 %v1296, %v1245
        %v1298 = vadd.f32 %v1297, %v1246
        %1299 = vadd.xlane.f32.xlu0 %v1298
        %v1300 = vpop.xlane.xlu0 %1299
        %v1301 = vadd.f32 %v1247, %v1248
        %v1302 = vadd.f32 %v1301, %v1249
        %v1303 = vadd.f32 %v1302, %v1250
        %v1304 = vadd.f32 %v1303, %v1251
        %v1305 = vadd.f32 %v1304, %v1252
        %1306 = vadd.xlane.f32.xlu0 %v1305
        %v1307 = vpop.xlane.xlu0 %1306
        %v1308 = vadd.f32 %v1253, %v1254
        %v1309 = vadd.f32 %v1308, %v1255
        %v1310 = vadd.f32 %v1309, %v1256
        %v1311 = vadd.f32 %v1310, %v1257
        %v1312 = vadd.f32 %v1311, %v1258
        %1313 = vadd.xlane.f32.xlu0 %v1312
        %v1314 = vpop.xlane.xlu0 %1313
        %v1323 = vlaneseq
        %v1324 = vshrl.u32 %v1323, 7
        %v1325 = vsub.s32 %v849, %v1324
        %v1326 = vrot.slane %v1265, %v1325
        %v1327 = vlaneseq
        %v1328 = vshrl.u32 %v1327, 7
        %v1329 = vsub.s32 %v849, %v1328
        %v1330 = vrot.slane %v1272, %v1329
        %v1331 = vlaneseq
        %v1332 = vshrl.u32 %v1331, 7
        %v1333 = vsub.s32 %v849, %v1332
        %v1334 = vrot.slane %v1279, %v1333
        %v1335 = vlaneseq
        %v1336 = vshrl.u32 %v1335, 7
        %v1337 = vsub.s32 %v849, %v1336
        %v1338 = vrot.slane %v1286, %v1337
        %v1339 = vlaneseq
        %v1340 = vshrl.u32 %v1339, 7
        %v1341 = vsub.s32 %v849, %v1340
        %v1342 = vrot.slane %v1293, %v1341
        %v1343 = vlaneseq
        %v1344 = vshrl.u32 %v1343, 7
        %v1345 = vsub.s32 %v849, %v1344
        %v1346 = vrot.slane %v1300, %v1345
        %v1347 = vlaneseq
        %v1348 = vshrl.u32 %v1347, 7
        %v1349 = vsub.s32 %v849, %v1348
        %v1350 = vrot.slane %v1307, %v1349
        %v1351 = vlaneseq
        %v1352 = vshrl.u32 %v1351, 7
        %v1353 = vsub.s32 %v849, %v1352
        %v1354 = vrot.slane %v1314, %v1353
        %v1355 = vsel %vm882, %v1330, %v1326
        %v1356 = vsel %vm884, %v1334, %v1355
        %v1357 = vsel %vm886, %v1338, %v1356
        %v1358 = vsel %vm888, %v1342, %v1357
        %v1359 = vsel %vm890, %v1346, %v1358
        %v1360 = vsel %vm892, %v1350, %v1359
        %v1361 = vsel %vm894, %v1354, %v1360
        %v1363 = vadd.f32 %v1210, %v1361
        %1364 = vst.msk [vmem:[#allocation5] sm:$0xff] %vm898, %v1363
        %p1365 = scmp.eq.s32.totalorder %s40, 2
        // Predicated region
        $region125: #{tpu_custom_call.1} parent=87 // pred_check
          %p1366 = pneg %p1365
        $region126: #{tpu_custom_call.1} parent=87 // pred_check_branch
          %1368 = sbr.rel (%p1366) target = $region128
        $region127: #{tpu_custom_call.1} parent=87 // pred_region
          %v1369 = vld [vmem:[#allocation2] sm:$0xff]
          %v1370 = vmul.f32 %v1369, 0.00043402778
          %v1371 = vld [vmem:[#allocation3] sm:$0xff]
          %v1372 = vmul.f32 %v1371, 0.00043402778
          %v1373 = vld [vmem:[#allocation4] sm:$0xff]
          %v1374 = vmul.f32 %v1373, 0.00043402778
          %v1375 = vld [vmem:[#allocation5] sm:$0xff]
          %v1376 = vmul.f32 %v1375, 0.00043402778
          %v1377 = vld [vmem:[%s4] sm:$0xff]
          %v1378 = vld [vmem:[%s5] sm:$0xff]
          %v1380 = vsel %vm898, %v1372, 0
          %1382 = vmatprep.subr.mxu0 0.0
          %1383 = vmatpush1.msra.mxu0 0.0
          %1384 = vmatprep.subr.mxu0 0.0
          %1385 = vmatpush1.msra.mxu0 0.0
          %1386 = vmatprep.subr.mxu0 0.0
          %1387 = vmatpush1.msra.mxu0 0.0
          %1388 = vmatprep.subr.mxu0 0.0
          %1389 = vmatpush1.msra.mxu0 0.0
          %1390 = vmatprep.subr.mxu0 0.0
          %1391 = vmatpush1.msra.mxu0 0.0
          %1392 = vmatprep.subr.mxu0 0.0
          %1393 = vmatpush1.msra.mxu0 0.0
          %1394 = vmatprep.subr.mxu0 0.0
          %1395 = vmatpush1.msra.mxu0 0.0
          %1396 = vmatprep.subr.mxu0 0.0
          %1397 = vmatpush1.msra.mxu0 0.0
          %1398 = vmatprep.subr.mxu0 0.0
          %1399 = vmatpush1.msra.mxu0 0.0
          %1400 = vmatprep.subr.mxu0 0.0
          %1401 = vmatpush1.msra.mxu0 0.0
          %1402 = vmatprep.subr.mxu0 0.0
          %1403 = vmatpush1.msra.mxu0 0.0
          %1404 = vmatprep.subr.mxu0 0.0
          %1405 = vmatpush1.msra.mxu0 0.0
          %1406 = vmatprep.subr.mxu0 0.0
          %1407 = vmatpush1.msra.mxu0 0.0
          %1408 = vmatprep.subr.mxu0 0.0
          %1409 = vmatpush1.msra.mxu0 0.0
          %1410 = vmatprep.subr.mxu0 0.0
          %1411 = vmatpush1.msra.mxu0 0.0
          %1412 = vmatprep.subr.mxu0 0.0
          %1413 = vmatpush1.msra.mxu0 %v1378
          %1414 = vmatprep.subr.mxu0 0.0
          %1415 = vmatpush2.msra.mxu0 0.0
          %1416 = vmatprep.subr.mxu0 0.0
          %1417 = vmatpush2.msra.mxu0 0.0
          %1418 = vmatprep.subr.mxu0 0.0
          %1419 = vmatpush2.msra.mxu0 0.0
          %1420 = vmatprep.subr.mxu0 0.0
          %1421 = vmatpush2.msra.mxu0 0.0
          %1422 = vmatprep.subr.mxu0 0.0
          %1423 = vmatpush2.msra.mxu0 0.0
          %1424 = vmatprep.subr.mxu0 0.0
          %1425 = vmatpush2.msra.mxu0 0.0
          %1426 = vmatprep.subr.mxu0 0.0
          %1427 = vmatpush2.msra.mxu0 0.0
          %1428 = vmatprep.subr.mxu0 0.0
          %1429 = vmatpush2.msra.mxu0 0.0
          %1430 = vmatprep.subr.mxu0 0.0
          %1431 = vmatpush2.msra.mxu0 0.0
          %1432 = vmatprep.subr.mxu0 0.0
          %1433 = vmatpush2.msra.mxu0 0.0
          %1434 = vmatprep.subr.mxu0 0.0
          %1435 = vmatpush2.msra.mxu0 0.0
          %1436 = vmatprep.subr.mxu0 0.0
          %1437 = vmatpush2.msra.mxu0 0.0
          %1438 = vmatprep.subr.mxu0 0.0
          %1439 = vmatpush2.msra.mxu0 0.0
          %1440 = vmatprep.subr.mxu0 0.0
          %1441 = vmatpush2.msra.mxu0 0.0
          %1442 = vmatprep.subr.mxu0 0.0
          %1443 = vmatpush2.msra.mxu0 0.0
          %1444 = vmatprep.subr.mxu0 0.0
          %1445 = vmatpush2.msra.mxu0 0.0
          %1446 = vmatprep.mubr.f32.mxu0 0.0
          %1447 = vmatmul.mubr.f32.gmra.mxu0 %v1380
          %v1448 = vpop.f32.mrf.mxu0
          %v1449 = vadd.f32 0.0, %v1448
          %v1450 = vpop.f32.mrf.mxu0
          %1451 = vdwg.mxu0
          %v1453 = vsel %vm898, %v1370, 0
          %1455 = vmatprep.subr.mxu0 0.0
          %1456 = vmatpush1.msra.mxu0 0.0
          %1457 = vmatprep.subr.mxu0 0.0
          %1458 = vmatpush1.msra.mxu0 0.0
          %1459 = vmatprep.subr.mxu0 0.0
          %1460 = vmatpush1.msra.mxu0 0.0
          %1461 = vmatprep.subr.mxu0 0.0
          %1462 = vmatpush1.msra.mxu0 0.0
          %1463 = vmatprep.subr.mxu0 0.0
          %1464 = vmatpush1.msra.mxu0 0.0
          %1465 = vmatprep.subr.mxu0 0.0
          %1466 = vmatpush1.msra.mxu0 0.0
          %1467 = vmatprep.subr.mxu0 0.0
          %1468 = vmatpush1.msra.mxu0 0.0
          %1469 = vmatprep.subr.mxu0 0.0
          %1470 = vmatpush1.msra.mxu0 0.0
          %1471 = vmatprep.subr.mxu0 0.0
          %1472 = vmatpush1.msra.mxu0 0.0
          %1473 = vmatprep.subr.mxu0 0.0
          %1474 = vmatpush1.msra.mxu0 0.0
          %1475 = vmatprep.subr.mxu0 0.0
          %1476 = vmatpush1.msra.mxu0 0.0
          %1477 = vmatprep.subr.mxu0 0.0
          %1478 = vmatpush1.msra.mxu0 0.0
          %1479 = vmatprep.subr.mxu0 0.0
          %1480 = vmatpush1.msra.mxu0 0.0
          %1481 = vmatprep.subr.mxu0 0.0
          %1482 = vmatpush1.msra.mxu0 0.0
          %1483 = vmatprep.subr.mxu0 0.0
          %1484 = vmatpush1.msra.mxu0 0.0
          %1485 = vmatprep.subr.mxu0 0.0
          %1486 = vmatpush1.msra.mxu0 %v1377
          %1487 = vmatprep.subr.mxu0 0.0
          %1488 = vmatpush2.msra.mxu0 0.0
          %1489 = vmatprep.subr.mxu0 0.0
          %1490 = vmatpush2.msra.mxu0 0.0
          %1491 = vmatprep.subr.mxu0 0.0
          %1492 = vmatpush2.msra.mxu0 0.0
          %1493 = vmatprep.subr.mxu0 0.0
          %1494 = vmatpush2.msra.mxu0 0.0
          %1495 = vmatprep.subr.mxu0 0.0
          %1496 = vmatpush2.msra.mxu0 0.0
          %1497 = vmatprep.subr.mxu0 0.0
          %1498 = vmatpush2.msra.mxu0 0.0
          %1499 = vmatprep.subr.mxu0 0.0
          %1500 = vmatpush2.msra.mxu0 0.0
          %1501 = vmatprep.subr.mxu0 0.0
          %1502 = vmatpush2.msra.mxu0 0.0
          %1503 = vmatprep.subr.mxu0 0.0
          %1504 = vmatpush2.msra.mxu0 0.0
          %1505 = vmatprep.subr.mxu0 0.0
          %1506 = vmatpush2.msra.mxu0 0.0
          %1507 = vmatprep.subr.mxu0 0.0
          %1508 = vmatpush2.msra.mxu0 0.0
          %1509 = vmatprep.subr.mxu0 0.0
          %1510 = vmatpush2.msra.mxu0 0.0
          %1511 = vmatprep.subr.mxu0 0.0
          %1512 = vmatpush2.msra.mxu0 0.0
          %1513 = vmatprep.subr.mxu0 0.0
          %1514 = vmatpush2.msra.mxu0 0.0
          %1515 = vmatprep.subr.mxu0 0.0
          %1516 = vmatpush2.msra.mxu0 0.0
          %1517 = vmatprep.subr.mxu0 0.0
          %1518 = vmatpush2.msra.mxu0 0.0
          %1519 = vmatprep.mubr.f32.mxu0 0.0
          %1520 = vmatmul.mubr.f32.gmra.mxu0 %v1453
          %v1521 = vpop.f32.mrf.mxu0
          %v1522 = vadd.f32 %v1449, %v1521
          %v1523 = vpop.f32.mrf.mxu0
          %1524 = vdwg.mxu0
          %v1525 = vld [vmem:[%s6] sm:$0xff]
          %v1527 = vsel %vm898, %v1374, 0
          %1529 = vmatprep.subr.mxu0 0.0
          %1530 = vmatpush1.msra.mxu0 0.0
          %1531 = vmatprep.subr.mxu0 0.0
          %1532 = vmatpush1.msra.mxu0 0.0
          %1533 = vmatprep.subr.mxu0 0.0
          %1534 = vmatpush1.msra.mxu0 0.0
          %1535 = vmatprep.subr.mxu0 0.0
          %1536 = vmatpush1.msra.mxu0 0.0
          %1537 = vmatprep.subr.mxu0 0.0
          %1538 = vmatpush1.msra.mxu0 0.0
          %1539 = vmatprep.subr.mxu0 0.0
          %1540 = vmatpush1.msra.mxu0 0.0
          %1541 = vmatprep.subr.mxu0 0.0
          %1542 = vmatpush1.msra.mxu0 0.0
          %1543 = vmatprep.subr.mxu0 0.0
          %1544 = vmatpush1.msra.mxu0 0.0
          %1545 = vmatprep.subr.mxu0 0.0
          %1546 = vmatpush1.msra.mxu0 0.0
          %1547 = vmatprep.subr.mxu0 0.0
          %1548 = vmatpush1.msra.mxu0 0.0
          %1549 = vmatprep.subr.mxu0 0.0
          %1550 = vmatpush1.msra.mxu0 0.0
          %1551 = vmatprep.subr.mxu0 0.0
          %1552 = vmatpush1.msra.mxu0 0.0
          %1553 = vmatprep.subr.mxu0 0.0
          %1554 = vmatpush1.msra.mxu0 0.0
          %1555 = vmatprep.subr.mxu0 0.0
          %1556 = vmatpush1.msra.mxu0 0.0
          %1557 = vmatprep.subr.mxu0 0.0
          %1558 = vmatpush1.msra.mxu0 0.0
          %1559 = vmatprep.subr.mxu0 0.0
          %1560 = vmatpush1.msra.mxu0 %v1525
          %1561 = vmatprep.subr.mxu0 0.0
          %1562 = vmatpush2.msra.mxu0 0.0
          %1563 = vmatprep.subr.mxu0 0.0
          %1564 = vmatpush2.msra.mxu0 0.0
          %1565 = vmatprep.subr.mxu0 0.0
          %1566 = vmatpush2.msra.mxu0 0.0
          %1567 = vmatprep.subr.mxu0 0.0
          %1568 = vmatpush2.msra.mxu0 0.0
          %1569 = vmatprep.subr.mxu0 0.0
          %1570 = vmatpush2.msra.mxu0 0.0
          %1571 = vmatprep.subr.mxu0 0.0
          %1572 = vmatpush2.msra.mxu0 0.0
          %1573 = vmatprep.subr.mxu0 0.0
          %1574 = vmatpush2.msra.mxu0 0.0
          %1575 = vmatprep.subr.mxu0 0.0
          %1576 = vmatpush2.msra.mxu0 0.0
          %1577 = vmatprep.subr.mxu0 0.0
          %1578 = vmatpush2.msra.mxu0 0.0
          %1579 = vmatprep.subr.mxu0 0.0
          %1580 = vmatpush2.msra.mxu0 0.0
          %1581 = vmatprep.subr.mxu0 0.0
          %1582 = vmatpush2.msra.mxu0 0.0
          %1583 = vmatprep.subr.mxu0 0.0
          %1584 = vmatpush2.msra.mxu0 0.0
          %1585 = vmatprep.subr.mxu0 0.0
          %1586 = vmatpush2.msra.mxu0 0.0
          %1587 = vmatprep.subr.mxu0 0.0
          %1588 = vmatpush2.msra.mxu0 0.0
          %1589 = vmatprep.subr.mxu0 0.0
          %1590 = vmatpush2.msra.mxu0 0.0
          %1591 = vmatprep.subr.mxu0 0.0
          %1592 = vmatpush2.msra.mxu0 0.0
          %1593 = vmatprep.mubr.f32.mxu0 0.0
          %1594 = vmatmul.mubr.f32.gmra.mxu0 %v1527
          %v1595 = vpop.f32.mrf.mxu0
          %v1596 = vadd.f32 0.0, %v1595
          %v1597 = vpop.f32.mrf.mxu0
          %1598 = vdwg.mxu0
          %v1599 = vadd.f32 %v1522, %v1596
          %v1600 = vld [vmem:[#allocation14] sm:$0x1]
          %v1602 = vlaneseq
          %v1603 = vshrl.u32 %v1602, 7
          %v1604 = vsub.s32 0, %v1603
          %v1605 = vrot.slane %v1600, %v1604
          %v1607 = vadd.f32 %v1599, %v1605
          %v1608 = vmax.f32 %v1607, 0.0
          %v1609 = vld [vmem:[%s8] sm:$0xff]
          %v1610 = vld [vmem:[%s9] sm:$0x1]
          %v1612 = vlaneseq
          %v1613 = vshrl.u32 %v1612, 7
          %v1614 = vsub.s32 0, %v1613
          %v1615 = vrot.slane %v1610, %v1614
          %v1618 = vsel %vm898, %v1608, 0
          %1620 = vmatprep.subr.mxu0 0.0
          %1621 = vmatpush1.msra.mxu0 0.0
          %1622 = vmatprep.subr.mxu0 0.0
          %1623 = vmatpush1.msra.mxu0 0.0
          %1624 = vmatprep.subr.mxu0 0.0
          %1625 = vmatpush1.msra.mxu0 0.0
          %1626 = vmatprep.subr.mxu0 0.0
          %1627 = vmatpush1.msra.mxu0 0.0
          %1628 = vmatprep.subr.mxu0 0.0
          %1629 = vmatpush1.msra.mxu0 0.0
          %1630 = vmatprep.subr.mxu0 0.0
          %1631 = vmatpush1.msra.mxu0 0.0
          %1632 = vmatprep.subr.mxu0 0.0
          %1633 = vmatpush1.msra.mxu0 0.0
          %1634 = vmatprep.subr.mxu0 0.0
          %1635 = vmatpush1.msra.mxu0 0.0
          %1636 = vmatprep.subr.mxu0 0.0
          %1637 = vmatpush1.msra.mxu0 0.0
          %1638 = vmatprep.subr.mxu0 0.0
          %1639 = vmatpush1.msra.mxu0 0.0
          %1640 = vmatprep.subr.mxu0 0.0
          %1641 = vmatpush1.msra.mxu0 0.0
          %1642 = vmatprep.subr.mxu0 0.0
          %1643 = vmatpush1.msra.mxu0 0.0
          %1644 = vmatprep.subr.mxu0 0.0
          %1645 = vmatpush1.msra.mxu0 0.0
          %1646 = vmatprep.subr.mxu0 0.0
          %1647 = vmatpush1.msra.mxu0 0.0
          %1648 = vmatprep.subr.mxu0 0.0
          %1649 = vmatpush1.msra.mxu0 0.0
          %1650 = vmatprep.subr.mxu0 0.0
          %1651 = vmatpush1.msra.mxu0 %v1609
          %1652 = vmatprep.subr.mxu0 0.0
          %1653 = vmatpush2.msra.mxu0 0.0
          %1654 = vmatprep.subr.mxu0 0.0
          %1655 = vmatpush2.msra.mxu0 0.0
          %1656 = vmatprep.subr.mxu0 0.0
          %1657 = vmatpush2.msra.mxu0 0.0
          %1658 = vmatprep.subr.mxu0 0.0
          %1659 = vmatpush2.msra.mxu0 0.0
          %1660 = vmatprep.subr.mxu0 0.0
          %1661 = vmatpush2.msra.mxu0 0.0
          %1662 = vmatprep.subr.mxu0 0.0
          %1663 = vmatpush2.msra.mxu0 0.0
          %1664 = vmatprep.subr.mxu0 0.0
          %1665 = vmatpush2.msra.mxu0 0.0
          %1666 = vmatprep.subr.mxu0 0.0
          %1667 = vmatpush2.msra.mxu0 0.0
          %1668 = vmatprep.subr.mxu0 0.0
          %1669 = vmatpush2.msra.mxu0 0.0
          %1670 = vmatprep.subr.mxu0 0.0
          %1671 = vmatpush2.msra.mxu0 0.0
          %1672 = vmatprep.subr.mxu0 0.0
          %1673 = vmatpush2.msra.mxu0 0.0
          %1674 = vmatprep.subr.mxu0 0.0
          %1675 = vmatpush2.msra.mxu0 0.0
          %1676 = vmatprep.subr.mxu0 0.0
          %1677 = vmatpush2.msra.mxu0 0.0
          %1678 = vmatprep.subr.mxu0 0.0
          %1679 = vmatpush2.msra.mxu0 0.0
          %1680 = vmatprep.subr.mxu0 0.0
          %1681 = vmatpush2.msra.mxu0 0.0
          %1682 = vmatprep.subr.mxu0 0.0
          %1683 = vmatpush2.msra.mxu0 0.0
          %1684 = vmatprep.mubr.f32.mxu0 0.0
          %1685 = vmatmul.mubr.f32.gmra.mxu0 %v1618
          %v1686 = vpop.f32.mrf.mxu0
          %v1687 = vadd.f32 %v1615, %v1686
          %v1688 = vpop.f32.mrf.mxu0
          %1689 = vdwg.mxu0
          %v1690 = vsel %vm898, %v1687, -inf
          %1691 = vmax.xlane.f32.xlu0 %v1690
          %v1692 = vpop.xlane.xlu0 %1691
          %v1693 = vsub.f32 %v1687, %v1692
          %v1694 = vmul.f32 %v1693, 1.442695
          %v1695 = vpow.pop %v1694
          %v1696 = vsel %vm898, %v1695, 0.0
          %1697 = vadd.xlane.f32.xlu0 %v1696
          %v1698 = vpop.xlane.xlu0 %1697
          %v1699 = vrcp.pop %v1698
          %v1700 = vmul.f32 %v1695, %v1699
          %1702 = vset.pattern.permute.xlu0 0
          %1703 = vperm.xlu0 %1702, %v1700
          %v1704 = vpop.permute.xlu0 %1703
          %v1706 = vmul.f32 %v1370, %v1704
          %1707 = vset.pattern.permute.xlu0 1
          %1708 = vperm.xlu0 %1707, %v1700
          %v1709 = vpop.permute.xlu0 %1708
          %v1711 = vmul.f32 %v1372, %v1709
          %v1712 = vadd.f32 %v1706, %v1711
          %1713 = vset.pattern.permute.xlu0 2
          %1714 = vperm.xlu0 %1713, %v1700
          %v1715 = vpop.permute.xlu0 %1714
          %v1717 = vmul.f32 %v1374, %v1715
          %v1718 = vadd.f32 %v1712, %v1717
          %v1719 = vld [vmem:[#allocation15] sm:$0xff]
          %v1720 = vld [vmem:[#allocation17] sm:$0xff]
          %v1722 = vsel %vm898, %v1376, 0
          %1724 = vmatprep.subr.mxu0 0.0
          %1725 = vmatpush1.msra.mxu0 0.0
          %1726 = vmatprep.subr.mxu0 0.0
          %1727 = vmatpush1.msra.mxu0 0.0
          %1728 = vmatprep.subr.mxu0 0.0
          %1729 = vmatpush1.msra.mxu0 0.0
          %1730 = vmatprep.subr.mxu0 0.0
          %1731 = vmatpush1.msra.mxu0 0.0
          %1732 = vmatprep.subr.mxu0 0.0
          %1733 = vmatpush1.msra.mxu0 0.0
          %1734 = vmatprep.subr.mxu0 0.0
          %1735 = vmatpush1.msra.mxu0 0.0
          %1736 = vmatprep.subr.mxu0 0.0
          %1737 = vmatpush1.msra.mxu0 0.0
          %1738 = vmatprep.subr.mxu0 0.0
          %1739 = vmatpush1.msra.mxu0 0.0
          %1740 = vmatprep.subr.mxu0 0.0
          %1741 = vmatpush1.msra.mxu0 0.0
          %1742 = vmatprep.subr.mxu0 0.0
          %1743 = vmatpush1.msra.mxu0 0.0
          %1744 = vmatprep.subr.mxu0 0.0
          %1745 = vmatpush1.msra.mxu0 0.0
          %1746 = vmatprep.subr.mxu0 0.0
          %1747 = vmatpush1.msra.mxu0 0.0
          %1748 = vmatprep.subr.mxu0 0.0
          %1749 = vmatpush1.msra.mxu0 0.0
          %1750 = vmatprep.subr.mxu0 0.0
          %1751 = vmatpush1.msra.mxu0 0.0
          %1752 = vmatprep.subr.mxu0 0.0
          %1753 = vmatpush1.msra.mxu0 0.0
          %1754 = vmatprep.subr.mxu0 0.0
          %1755 = vmatpush1.msra.mxu0 %v1720
          %1756 = vmatprep.subr.mxu0 0.0
          %1757 = vmatpush2.msra.mxu0 0.0
          %1758 = vmatprep.subr.mxu0 0.0
          %1759 = vmatpush2.msra.mxu0 0.0
          %1760 = vmatprep.subr.mxu0 0.0
          %1761 = vmatpush2.msra.mxu0 0.0
          %1762 = vmatprep.subr.mxu0 0.0
          %1763 = vmatpush2.msra.mxu0 0.0
          %1764 = vmatprep.subr.mxu0 0.0
          %1765 = vmatpush2.msra.mxu0 0.0
          %1766 = vmatprep.subr.mxu0 0.0
          %1767 = vmatpush2.msra.mxu0 0.0
          %1768 = vmatprep.subr.mxu0 0.0
          %1769 = vmatpush2.msra.mxu0 0.0
          %1770 = vmatprep.subr.mxu0 0.0
          %1771 = vmatpush2.msra.mxu0 0.0
          %1772 = vmatprep.subr.mxu0 0.0
          %1773 = vmatpush2.msra.mxu0 0.0
          %1774 = vmatprep.subr.mxu0 0.0
          %1775 = vmatpush2.msra.mxu0 0.0
          %1776 = vmatprep.subr.mxu0 0.0
          %1777 = vmatpush2.msra.mxu0 0.0
          %1778 = vmatprep.subr.mxu0 0.0
          %1779 = vmatpush2.msra.mxu0 0.0
          %1780 = vmatprep.subr.mxu0 0.0
          %1781 = vmatpush2.msra.mxu0 0.0
          %1782 = vmatprep.subr.mxu0 0.0
          %1783 = vmatpush2.msra.mxu0 0.0
          %1784 = vmatprep.subr.mxu0 0.0
          %1785 = vmatpush2.msra.mxu0 0.0
          %1786 = vmatprep.subr.mxu0 0.0
          %1787 = vmatpush2.msra.mxu0 0.0
          %1788 = vmatprep.mubr.f32.mxu0 0.0
          %1789 = vmatmul.mubr.f32.gmra.mxu0 %v1722
          %v1790 = vpop.f32.mrf.mxu0
          %v1791 = vadd.f32 0.0, %v1790
          %v1792 = vpop.f32.mrf.mxu0
          %1793 = vdwg.mxu0
          %v1795 = vsel %vm898, %v1718, 0
          %1797 = vmatprep.subr.mxu0 0.0
          %1798 = vmatpush1.msra.mxu0 0.0
          %1799 = vmatprep.subr.mxu0 0.0
          %1800 = vmatpush1.msra.mxu0 0.0
          %1801 = vmatprep.subr.mxu0 0.0
          %1802 = vmatpush1.msra.mxu0 0.0
          %1803 = vmatprep.subr.mxu0 0.0
          %1804 = vmatpush1.msra.mxu0 0.0
          %1805 = vmatprep.subr.mxu0 0.0
          %1806 = vmatpush1.msra.mxu0 0.0
          %1807 = vmatprep.subr.mxu0 0.0
          %1808 = vmatpush1.msra.mxu0 0.0
          %1809 = vmatprep.subr.mxu0 0.0
          %1810 = vmatpush1.msra.mxu0 0.0
          %1811 = vmatprep.subr.mxu0 0.0
          %1812 = vmatpush1.msra.mxu0 0.0
          %1813 = vmatprep.subr.mxu0 0.0
          %1814 = vmatpush1.msra.mxu0 0.0
          %1815 = vmatprep.subr.mxu0 0.0
          %1816 = vmatpush1.msra.mxu0 0.0
          %1817 = vmatprep.subr.mxu0 0.0
          %1818 = vmatpush1.msra.mxu0 0.0
          %1819 = vmatprep.subr.mxu0 0.0
          %1820 = vmatpush1.msra.mxu0 0.0
          %1821 = vmatprep.subr.mxu0 0.0
          %1822 = vmatpush1.msra.mxu0 0.0
          %1823 = vmatprep.subr.mxu0 0.0
          %1824 = vmatpush1.msra.mxu0 0.0
          %1825 = vmatprep.subr.mxu0 0.0
          %1826 = vmatpush1.msra.mxu0 0.0
          %1827 = vmatprep.subr.mxu0 0.0
          %1828 = vmatpush1.msra.mxu0 %v1719
          %1829 = vmatprep.subr.mxu0 0.0
          %1830 = vmatpush2.msra.mxu0 0.0
          %1831 = vmatprep.subr.mxu0 0.0
          %1832 = vmatpush2.msra.mxu0 0.0
          %1833 = vmatprep.subr.mxu0 0.0
          %1834 = vmatpush2.msra.mxu0 0.0
          %1835 = vmatprep.subr.mxu0 0.0
          %1836 = vmatpush2.msra.mxu0 0.0
          %1837 = vmatprep.subr.mxu0 0.0
          %1838 = vmatpush2.msra.mxu0 0.0
          %1839 = vmatprep.subr.mxu0 0.0
          %1840 = vmatpush2.msra.mxu0 0.0
          %1841 = vmatprep.subr.mxu0 0.0
          %1842 = vmatpush2.msra.mxu0 0.0
          %1843 = vmatprep.subr.mxu0 0.0
          %1844 = vmatpush2.msra.mxu0 0.0
          %1845 = vmatprep.subr.mxu0 0.0
          %1846 = vmatpush2.msra.mxu0 0.0
          %1847 = vmatprep.subr.mxu0 0.0
          %1848 = vmatpush2.msra.mxu0 0.0
          %1849 = vmatprep.subr.mxu0 0.0
          %1850 = vmatpush2.msra.mxu0 0.0
          %1851 = vmatprep.subr.mxu0 0.0
          %1852 = vmatpush2.msra.mxu0 0.0
          %1853 = vmatprep.subr.mxu0 0.0
          %1854 = vmatpush2.msra.mxu0 0.0
          %1855 = vmatprep.subr.mxu0 0.0
          %1856 = vmatpush2.msra.mxu0 0.0
          %1857 = vmatprep.subr.mxu0 0.0
          %1858 = vmatpush2.msra.mxu0 0.0
          %1859 = vmatprep.subr.mxu0 0.0
          %1860 = vmatpush2.msra.mxu0 0.0
          %1861 = vmatprep.mubr.f32.mxu0 0.0
          %1862 = vmatmul.mubr.f32.gmra.mxu0 %v1795
          %v1863 = vpop.f32.mrf.mxu0
          %v1864 = vadd.f32 %v1791, %v1863
          %v1865 = vpop.f32.mrf.mxu0
          %1866 = vdwg.mxu0
          %v1867 = vld [vmem:[#allocation18] sm:$0x1]
          %v1869 = vlaneseq
          %v1870 = vshrl.u32 %v1869, 7
          %v1871 = vsub.s32 0, %v1870
          %v1872 = vrot.slane %v1867, %v1871
          %v1874 = vadd.f32 %v1864, %v1872
          %v1875 = vmax.f32 %v1874, 0.0
          %v1876 = vld [vmem:[%s13] sm:$0xff]
          %v1877 = vld [vmem:[%s13 + $0x8] sm:$0xff]
          %v1878 = vld [vmem:[%s14] sm:$0x1]
          %v1880 = vlaneseq
          %v1881 = vshrl.u32 %v1880, 7
          %v1882 = vsub.s32 0, %v1881
          %v1883 = vrot.slane %v1878, %v1882
          %vm1885 = vcmask 130048
          %v1887 = vsel %vm1885, %v1875, 0
          %1889 = vmatprep.subr.mxu0 0.0
          %1890 = vmatpush1.msra.mxu0 0.0
          %1891 = vmatprep.subr.mxu0 0.0
          %1892 = vmatpush1.msra.mxu0 0.0
          %1893 = vmatprep.subr.mxu0 0.0
          %1894 = vmatpush1.msra.mxu0 0.0
          %1895 = vmatprep.subr.mxu0 0.0
          %1896 = vmatpush1.msra.mxu0 0.0
          %1897 = vmatprep.subr.mxu0 0.0
          %1898 = vmatpush1.msra.mxu0 0.0
          %1899 = vmatprep.subr.mxu0 0.0
          %1900 = vmatpush1.msra.mxu0 0.0
          %1901 = vmatprep.subr.mxu0 0.0
          %1902 = vmatpush1.msra.mxu0 0.0
          %1903 = vmatprep.subr.mxu0 0.0
          %1904 = vmatpush1.msra.mxu0 0.0
          %1905 = vmatprep.subr.mxu0 0.0
          %1906 = vmatpush1.msra.mxu0 0.0
          %1907 = vmatprep.subr.mxu0 0.0
          %1908 = vmatpush1.msra.mxu0 0.0
          %1909 = vmatprep.subr.mxu0 0.0
          %1910 = vmatpush1.msra.mxu0 0.0
          %1911 = vmatprep.subr.mxu0 0.0
          %1912 = vmatpush1.msra.mxu0 0.0
          %1913 = vmatprep.subr.mxu0 0.0
          %1914 = vmatpush1.msra.mxu0 0.0
          %1915 = vmatprep.subr.mxu0 0.0
          %1916 = vmatpush1.msra.mxu0 0.0
          %1917 = vmatprep.subr.mxu0 0.0
          %1918 = vmatpush1.msra.mxu0 %v1877
          %1919 = vmatprep.subr.mxu0 0.0
          %1920 = vmatpush1.msra.mxu0 %v1876
          %1921 = vmatprep.subr.mxu0 0.0
          %1922 = vmatpush2.msra.mxu0 0.0
          %1923 = vmatprep.subr.mxu0 0.0
          %1924 = vmatpush2.msra.mxu0 0.0
          %1925 = vmatprep.subr.mxu0 0.0
          %1926 = vmatpush2.msra.mxu0 0.0
          %1927 = vmatprep.subr.mxu0 0.0
          %1928 = vmatpush2.msra.mxu0 0.0
          %1929 = vmatprep.subr.mxu0 0.0
          %1930 = vmatpush2.msra.mxu0 0.0
          %1931 = vmatprep.subr.mxu0 0.0
          %1932 = vmatpush2.msra.mxu0 0.0
          %1933 = vmatprep.subr.mxu0 0.0
          %1934 = vmatpush2.msra.mxu0 0.0
          %1935 = vmatprep.subr.mxu0 0.0
          %1936 = vmatpush2.msra.mxu0 0.0
          %1937 = vmatprep.subr.mxu0 0.0
          %1938 = vmatpush2.msra.mxu0 0.0
          %1939 = vmatprep.subr.mxu0 0.0
          %1940 = vmatpush2.msra.mxu0 0.0
          %1941 = vmatprep.subr.mxu0 0.0
          %1942 = vmatpush2.msra.mxu0 0.0
          %1943 = vmatprep.subr.mxu0 0.0
          %1944 = vmatpush2.msra.mxu0 0.0
          %1945 = vmatprep.subr.mxu0 0.0
          %1946 = vmatpush2.msra.mxu0 0.0
          %1947 = vmatprep.subr.mxu0 0.0
          %1948 = vmatpush2.msra.mxu0 0.0
          %1949 = vmatprep.subr.mxu0 0.0
          %1950 = vmatpush2.msra.mxu0 0.0
          %1951 = vmatprep.subr.mxu0 0.0
          %1952 = vmatpush2.msra.mxu0 0.0
          %1953 = vmatprep.mubr.f32.mxu0 0.0
          %1954 = vmatmul.mubr.f32.gmra.mxu0 %v1887
          %v1955 = vpop.f32.mrf.mxu0
          %v1956 = vadd.f32 %v1883, %v1955
          %v1957 = vpop.f32.mrf.mxu0
          %1958 = vdwg.mxu0
          %vm1959 = vcmask 15360
          %v1960 = vsel %vm1959, %v1956, -inf
          %1961 = vmax.xlane.f32.xlu0 %v1960
          %v1962 = vpop.xlane.xlu0 %1961
          %v1963 = vsub.f32 %v1956, %v1962
          %v1964 = vmul.f32 %v1963, 1.442695
          %v1965 = vpow.pop %v1964
          %v1966 = vsel %vm1959, %v1965, 0.0
          %1967 = vadd.xlane.f32.xlu0 %v1966
          %v1968 = vpop.xlane.xlu0 %1967
          %v1969 = vrcp.pop %v1968
          %v1970 = vmul.f32 %v1965, %v1969
          %v1971 = vld [vmem:[%s15] sm:$0xff]
          %1973 = vset.pattern.permute.xlu0 0
          %1974 = vperm.xlu0 %1973, %v1970
          %v1975 = vpop.permute.xlu0 %1974
          %v1977 = vmul.f32 %v1975, %v1971
          %1978 = vset.pattern.permute.xlu0 1
          %1979 = vperm.xlu0 %1978, %v1970
          %v1980 = vpop.permute.xlu0 %1979
          %v1982 = vmul.f32 %v1980, %v1971
          %1983 = vmatprep.subr.mxu0 0.0
          %1984 = vmatpush1.msra.mxu0 0.0
          %1985 = vmatprep.subr.mxu0 0.0
          %1986 = vmatpush1.msra.mxu0 0.0
          %1987 = vmatprep.subr.mxu0 0.0
          %1988 = vmatpush1.msra.mxu0 0.0
          %1989 = vmatprep.subr.mxu0 0.0
          %1990 = vmatpush1.msra.mxu0 0.0
          %1991 = vmatprep.subr.mxu0 0.0
          %1992 = vmatpush1.msra.mxu0 0.0
          %1993 = vmatprep.subr.mxu0 0.0
          %1994 = vmatpush1.msra.mxu0 0.0
          %1995 = vmatprep.subr.mxu0 0.0
          %1996 = vmatpush1.msra.mxu0 0.0
          %1997 = vmatprep.subr.mxu0 0.0
          %1998 = vmatpush1.msra.mxu0 0.0
          %1999 = vmatprep.subr.mxu0 0.0
          %2000 = vmatpush1.msra.mxu0 0.0
          %2001 = vmatprep.subr.mxu0 0.0
          %2002 = vmatpush1.msra.mxu0 0.0
          %2003 = vmatprep.subr.mxu0 0.0
          %2004 = vmatpush1.msra.mxu0 0.0
          %2005 = vmatprep.subr.mxu0 0.0
          %2006 = vmatpush1.msra.mxu0 0.0
          %2007 = vmatprep.subr.mxu0 0.0
          %2008 = vmatpush1.msra.mxu0 0.0
          %2009 = vmatprep.subr.mxu0 0.0
          %2010 = vmatpush1.msra.mxu0 0.0
          %2011 = vmatprep.subr.mxu0 0.0
          %2012 = vmatpush1.msra.mxu0 0.0
          %2013 = vmatprep.subr.mxu0 0.0
          %2014 = vmatpush1.msra.mxu0 %v1982
          %2015 = vmatprep.subr.mxu0 0.0
          %2016 = vmatpush2.msra.mxu0 0.0
          %2017 = vmatprep.subr.mxu0 0.0
          %2018 = vmatpush2.msra.mxu0 0.0
          %2019 = vmatprep.subr.mxu0 0.0
          %2020 = vmatpush2.msra.mxu0 0.0
          %2021 = vmatprep.subr.mxu0 0.0
          %2022 = vmatpush2.msra.mxu0 0.0
          %2023 = vmatprep.subr.mxu0 0.0
          %2024 = vmatpush2.msra.mxu0 0.0
          %2025 = vmatprep.subr.mxu0 0.0
          %2026 = vmatpush2.msra.mxu0 0.0
          %2027 = vmatprep.subr.mxu0 0.0
          %2028 = vmatpush2.msra.mxu0 0.0
          %2029 = vmatprep.subr.mxu0 0.0
          %2030 = vmatpush2.msra.mxu0 0.0
          %2031 = vmatprep.subr.mxu0 0.0
          %2032 = vmatpush2.msra.mxu0 0.0
          %2033 = vmatprep.subr.mxu0 0.0
          %2034 = vmatpush2.msra.mxu0 0.0
          %2035 = vmatprep.subr.mxu0 0.0
          %2036 = vmatpush2.msra.mxu0 0.0
          %2037 = vmatprep.subr.mxu0 0.0
          %2038 = vmatpush2.msra.mxu0 0.0
          %2039 = vmatprep.subr.mxu0 0.0
          %2040 = vmatpush2.msra.mxu0 0.0
          %2041 = vmatprep.subr.mxu0 0.0
          %2042 = vmatpush2.msra.mxu0 0.0
          %2043 = vmatprep.subr.mxu0 0.0
          %2044 = vmatpush2.msra.mxu0 0.0
          %2045 = vmatprep.subr.mxu0 0.0
          %2046 = vmatpush2.msra.mxu0 0.0
          %2047 = vmatprep.mubr.f32.mxu0 0.0
          %2048 = vmatmul.mubr.f32.gmra.mxu0 %v1722
          %v2049 = vpop.f32.mrf.mxu0
          %v2050 = vadd.f32 0.0, %v2049
          %v2051 = vpop.f32.mrf.mxu0
          %2052 = vdwg.mxu0
          %2053 = vmatprep.subr.mxu0 0.0
          %2054 = vmatpush1.msra.mxu0 0.0
          %2055 = vmatprep.subr.mxu0 0.0
          %2056 = vmatpush1.msra.mxu0 0.0
          %2057 = vmatprep.subr.mxu0 0.0
          %2058 = vmatpush1.msra.mxu0 0.0
          %2059 = vmatprep.subr.mxu0 0.0
          %2060 = vmatpush1.msra.mxu0 0.0
          %2061 = vmatprep.subr.mxu0 0.0
          %2062 = vmatpush1.msra.mxu0 0.0
          %2063 = vmatprep.subr.mxu0 0.0
          %2064 = vmatpush1.msra.mxu0 0.0
          %2065 = vmatprep.subr.mxu0 0.0
          %2066 = vmatpush1.msra.mxu0 0.0
          %2067 = vmatprep.subr.mxu0 0.0
          %2068 = vmatpush1.msra.mxu0 0.0
          %2069 = vmatprep.subr.mxu0 0.0
          %2070 = vmatpush1.msra.mxu0 0.0
          %2071 = vmatprep.subr.mxu0 0.0
          %2072 = vmatpush1.msra.mxu0 0.0
          %2073 = vmatprep.subr.mxu0 0.0
          %2074 = vmatpush1.msra.mxu0 0.0
          %2075 = vmatprep.subr.mxu0 0.0
          %2076 = vmatpush1.msra.mxu0 0.0
          %2077 = vmatprep.subr.mxu0 0.0
          %2078 = vmatpush1.msra.mxu0 0.0
          %2079 = vmatprep.subr.mxu0 0.0
          %2080 = vmatpush1.msra.mxu0 0.0
          %2081 = vmatprep.subr.mxu0 0.0
          %2082 = vmatpush1.msra.mxu0 0.0
          %2083 = vmatprep.subr.mxu0 0.0
          %2084 = vmatpush1.msra.mxu0 %v1977
          %2085 = vmatprep.subr.mxu0 0.0
          %2086 = vmatpush2.msra.mxu0 0.0
          %2087 = vmatprep.subr.mxu0 0.0
          %2088 = vmatpush2.msra.mxu0 0.0
          %2089 = vmatprep.subr.mxu0 0.0
          %2090 = vmatpush2.msra.mxu0 0.0
          %2091 = vmatprep.subr.mxu0 0.0
          %2092 = vmatpush2.msra.mxu0 0.0
          %2093 = vmatprep.subr.mxu0 0.0
          %2094 = vmatpush2.msra.mxu0 0.0
          %2095 = vmatprep.subr.mxu0 0.0
          %2096 = vmatpush2.msra.mxu0 0.0
          %2097 = vmatprep.subr.mxu0 0.0
          %2098 = vmatpush2.msra.mxu0 0.0
          %2099 = vmatprep.subr.mxu0 0.0
          %2100 = vmatpush2.msra.mxu0 0.0
          %2101 = vmatprep.subr.mxu0 0.0
          %2102 = vmatpush2.msra.mxu0 0.0
          %2103 = vmatprep.subr.mxu0 0.0
          %2104 = vmatpush2.msra.mxu0 0.0
          %2105 = vmatprep.subr.mxu0 0.0
          %2106 = vmatpush2.msra.mxu0 0.0
          %2107 = vmatprep.subr.mxu0 0.0
          %2108 = vmatpush2.msra.mxu0 0.0
          %2109 = vmatprep.subr.mxu0 0.0
          %2110 = vmatpush2.msra.mxu0 0.0
          %2111 = vmatprep.subr.mxu0 0.0
          %2112 = vmatpush2.msra.mxu0 0.0
          %2113 = vmatprep.subr.mxu0 0.0
          %2114 = vmatpush2.msra.mxu0 0.0
          %2115 = vmatprep.subr.mxu0 0.0
          %2116 = vmatpush2.msra.mxu0 0.0
          %2117 = vmatprep.mubr.f32.mxu0 0.0
          %2118 = vmatmul.mubr.f32.gmra.mxu0 %v1795
          %v2119 = vpop.f32.mrf.mxu0
          %v2120 = vadd.f32 %v2050, %v2119
          %v2121 = vpop.f32.mrf.mxu0
          %2122 = vdwg.mxu0
          %v2123 = vld [vmem:[%s16] sm:$0x1]
          %v2125 = vlaneseq
          %v2126 = vshrl.u32 %v2125, 7
          %v2127 = vsub.s32 0, %v2126
          %v2128 = vrot.slane %v2123, %v2127
          %v2130 = vadd.f32 %v2120, %v2128
          %2131 = vst [vmem:[#allocation20] sm:$0xff] %v2130
        $region128: #{tpu_custom_call.1} parent=87 // pred_fallthru
          _
        // Predicated region
        $region129: #{tpu_custom_call.1} parent=87 // pred_check
          %p2132 = pneg %p430
        $region130: #{tpu_custom_call.1} parent=87 // pred_check_branch
          %2134 = sbr.rel (%p2132) target = $region132
        $region131: #{tpu_custom_call.1} parent=87 // pred_region
          %s2136 = ssub.s32 128, 128
          %2137 = vsyncadd [#allocation8], %s2136
          %s2139 = sshll.u32 [#allocation20], 4
          %s2140 = int_to_ptr.vmem [resolvable:$true] %s2139
          %2142 = dma.vmem_to_hbm [thread:$0]  %s2140, 128, %s17, [#allocation8]
        $region132: #{tpu_custom_call.1} parent=87 // pred_fallthru
          _
        // Predicated region
        $region133: #{tpu_custom_call.1} parent=87 // pred_check
          %p2143 = pneg %p430
        $region134: #{tpu_custom_call.1} parent=87 // pred_check_branch
          %2145 = sbr.rel (%p2143) target = $region136
        $region135: #{tpu_custom_call.1} parent=87 // pred_region
          %2146 = dma.done [#allocation8], 128
        $region136: #{tpu_custom_call.1} parent=87 // pred_fallthru
          _
      $region88: #{tpu_custom_call.1} parent=5 // pred_fallthru
        _
      %p2147 = scmp.le.s32.totalorder 2, %s35
      // Predicated region
      $region137: #{tpu_custom_call.1} parent=5 // pred_check
        %p2148 = pneg %p2147
      $region138: #{tpu_custom_call.1} parent=5 // pred_check_branch
        %2150 = sbr.rel (%p2148) target = $region140
      $region139: #{tpu_custom_call.1} parent=5 // pred_region
        %s2151 = ssub.s32 %s35, 2
      $region140: #{tpu_custom_call.1} parent=5 // pred_fallthru
        _
    $region6: #{tpu_custom_call.1} parent=1 // loop_footer
      %s39 = sadd.s32 1, %s35
    $region7: #{tpu_custom_call.1} parent=1 // loop_footer_branch
      %34 = sbr.rel target = $region3
    $region8: #{tpu_custom_call.1} parent=1 // loop_exit
      _
    %2152 = vsyncpa [#allocation7], 1
    %s2153 = scalar_lea.sflag [#allocation7], 1
    %2154 = vsyncpa %s2153, 1
    %2155 = vsyncpa [#allocation10], 1
    %s2156 = scalar_lea.sflag [#allocation10], 1
    %2157 = vsyncpa %s2156, 1
    %2158 = vsyncpa [#allocation13], 1
    %s2159 = scalar_lea.sflag [#allocation13], 1
    %2160 = vsyncpa %s2159, 1
    %2161 = vsyncpa [#allocation16], 1
    %2162 = vsyncpa [#allocation19], 1
    %2163 = vsyncpa [#allocation8], 1
    %s2164 = scalar_lea.sflag [#allocation8], 1
    %2165 = vsyncpa %s2164, 1

</llo_original>
